<compile_context>
chip_gen: v5e
topology: v5e:2x2
jax: 0.10.0
libtpu: 0.0.40
codegen_flags: <defaults>
</compile_context>

<pallas_src>
import functools

import jax
import jax.numpy as jnp
import numpy as np
from jax import lax
from jax.experimental import pallas as pl
from jax.experimental.pallas import tpu as pltpu


def _convlstm_kernel(x_ref, w_ref, b_ref, fcw_ref, fcb_ref, out_ref, comb_sc,
                     *, seq_len, width, hidden, matmul_dtype):
    """Single invocation per batch block: full time recurrence inside."""
    T, W, H = seq_len, width, hidden
    C = 1 + H                       # combined channels (input + hidden)
    bb = x_ref.shape[1]             # batch elements in this block

    # Zero the width-halo staging buffer once (rows 0 and W+1 stay zero; the
    # interior is overwritten every step).
    comb_sc[...] = jnp.zeros_like(comb_sc)

    w_mat = w_ref[...]              # (3*C, 4H) fused conv weight
    if matmul_dtype != jnp.float32:
        w_mat = w_mat.astype(matmul_dtype)
    bias = b_ref[...]               # (1, 4H)

    def step(t, carry):
        h, c = carry                                            # (bb, W, H)
        x_t = x_ref[t]                                          # (bb, W)

        # combined = [x, h] along channels (PyTorch cat order), channels-last.
        combined = jnp.concatenate([x_t[:, :, None], h], axis=-1)   # (bb,W,C)
        comb_sc[:, 1:W + 1, :] = combined                       # fill interior

        # im2col: taps k=0,1,2 are static halo slices -> (bb, W, 3*C).
        cols = jnp.concatenate(
            [comb_sc[:, 0:W, :],        # left tap  (w-1, zero-padded)
             combined,                  # center tap (w)
             comb_sc[:, 2:W + 2, :]],   # right tap (w+1, zero-padded)
            axis=-1)
        cols2d = cols.reshape(bb * W, 3 * C)
        if matmul_dtype != jnp.float32:
            cols2d = cols2d.astype(matmul_dtype)

        # One MXU matmul for all taps + channels:  (bb*W, 3C) @ (3C, 4H).
        acc = jnp.dot(cols2d, w_mat, preferred_element_type=jnp.float32)
        acc = acc + bias                                        # (bb*W, 4H)

        # Full-lane-width activations; lanes >= 3H (the g gate) use tanh.
        lane = lax.broadcasted_iota(jnp.int32, acc.shape, 1)
        act = jnp.where(lane >= 3 * H, jnp.tanh(acc), jax.nn.sigmoid(acc))
        act = act.reshape(bb, W, 4 * H)

        i = act[..., 0 * H:1 * H]
        f = act[..., 1 * H:2 * H]
        o = act[..., 2 * H:3 * H]
        g = act[..., 3 * H:4 * H]

        c_n = f * c + i * g
        h_n = o * jnp.tanh(c_n)
        return (h_n, c_n)

    h0 = jnp.zeros((bb, W, H), jnp.float32)
    c0 = jnp.zeros((bb, W, H), jnp.float32)
    h_T, _ = lax.fori_loop(0, T, step, (h0, c0), unroll=True)

    # AdaptiveAvgPool1d(1) over width + Linear(H, 1), on the VPU.
    pooled = jnp.sum(h_T, axis=1) * (1.0 / W)                   # (bb, H)
    out = jnp.sum(pooled * fcw_ref[...], axis=-1, keepdims=True) + fcb_ref[...]
    out_ref[...] = out.astype(out_ref.dtype)                    # written always


def convlstm_regressor_forward(x, conv_w, conv_b, fc_w, fc_b, *, hidden,
                               num_batch_blocks=1,
                               matmul_dtype=jnp.float32):
    """x: (B, T, W) float32.  Params in PyTorch layout:
       conv_w (4H, 1+H, 3), conv_b (4H,), fc_w (1, H), fc_b (1,).

    num_batch_blocks: split the batch over a 'parallel' grid axis (v7x: set
    to 2 to use both TensorCores once B is large enough; keep B*W/blocks a
    multiple of 8).
    matmul_dtype: jnp.bfloat16 casts only the MXU operands (state stays f32);
    loosen numerical tolerances if enabled.
    """
    B, T, W = x.shape
    H = hidden
    assert B % num_batch_blocks == 0
    bb = B // num_batch_blocks

    # Fused conv weight: row index = k*(1+H) + channel, matching the im2col
    # lane order [tap0: x,h | tap1: x,h | tap2: x,h].
    w_mat = jnp.transpose(conv_w, (2, 1, 0)).reshape(3 * (1 + H), 4 * H)
    b2 = conv_b.reshape(1, 4 * H)
    fcw = fc_w.reshape(1, H)
    fcb = fc_b.reshape(1, 1)
    x_k = jnp.transpose(x, (1, 0, 2))                  # (T, B, W)

    kernel = functools.partial(_convlstm_kernel, seq_len=T, width=W, hidden=H,
                               matmul_dtype=matmul_dtype)

    return pl.pallas_call(
        kernel,
        out_shape=jax.ShapeDtypeStruct((B, 1), jnp.float32),
        grid_spec=pltpu.PrefetchScalarGridSpec(
            num_scalar_prefetch=0,
            grid=(num_batch_blocks,),                  # time axis removed
            in_specs=[
                pl.BlockSpec((T, bb, W), lambda b: (0, b, 0)),          # x
                pl.BlockSpec((3 * (1 + H), 4 * H), lambda b: (0, 0)),   # Wconv
                pl.BlockSpec((1, 4 * H), lambda b: (0, 0)),             # bconv
                pl.BlockSpec((1, H), lambda b: (0, 0)),                 # fc w
                pl.BlockSpec((1, 1), lambda b: (0, 0)),                 # fc b
            ],
            out_specs=pl.BlockSpec((bb, 1), lambda b: (b, 0)),
            scratch_shapes=[
                # width-halo staging buffer for [x, h] (halo rows stay zero)
                pltpu.VMEM((bb, W + 2, 1 + H), jnp.float32),
            ],
        ),
        compiler_params=pltpu.CompilerParams(
            dimension_semantics=("parallel",),         # batch blocks
        ),
    )(x_k, w_mat, b2, fcw, fcb)


def reference_forward(x, conv_w, conv_b, fc_w, fc_b, *, hidden):
    """Pure-JAX reference in PyTorch NCW layout (mirrors the nn.Module)."""
    B, T, W = x.shape
    H = hidden
    h = jnp.zeros((B, H, W), jnp.float32)
    c = jnp.zeros((B, H, W), jnp.float32)
    for t in range(T):
        inp = x[:, t, :][:, None, :]                               # (B, 1, W)
        combined = jnp.concatenate([inp, h], axis=1)               # (B, 1+H, W)
        conv_out = jax.lax.conv_general_dilated(
            combined, conv_w, window_strides=(1,), padding=((1, 1),),
            dimension_numbers=('NCH', 'OIH', 'NCH')) + conv_b[None, :, None]
        i = jax.nn.sigmoid(conv_out[:, 0 * H:1 * H])
        f = jax.nn.sigmoid(conv_out[:, 1 * H:2 * H])
        o = jax.nn.sigmoid(conv_out[:, 2 * H:3 * H])
        g = jnp.tanh(conv_out[:, 3 * H:4 * H])
        c = f * c + i * g
        h = o * jnp.tanh(c)
    pooled = jnp.mean(h, axis=-1)                                  # (B, H)
    return pooled @ fc_w.T + fc_b[None, :]


if __name__ == "__main__":
    # Shapes consistent with the module's forward: x is (batch, seq_len, n_nodes)
    B, T, W, H, K = 2, 8, 16, 32, 3

    key = jax.random.PRNGKey(0)
    kx, kw, kb, kfw, kfb = jax.random.split(key, 5)

    x = jax.random.normal(kx, (B, T, W), dtype=jnp.float32)
    conv_w = jax.random.normal(kw, (4 * H, 1 + H, K), dtype=jnp.float32) * 0.1
    conv_b = jax.random.normal(kb, (4 * H,), dtype=jnp.float32) * 0.1
    fc_w = jax.random.normal(kfw, (1, H), dtype=jnp.float32) * 0.1
    fc_b = jax.random.normal(kfb, (1,), dtype=jnp.float32) * 0.1

    out = convlstm_regressor_forward(x, conv_w, conv_b, fc_w, fc_b, hidden=H)
    out = jax.block_until_ready(out)

    ref = jax.block_until_ready(
        reference_forward(x, conv_w, conv_b, fc_w, fc_b, hidden=H))

    assert out.shape == (B, 1), out.shape
    np.testing.assert_allclose(np.asarray(out), np.asarray(ref),
                               rtol=5e-5, atol=5e-5)
    print("KERNEL_OK")
</pallas_src>

<mosaic_0001>
module attributes {stable_mosaic.version = 11 : i64} {
  func.func @_convlstm_kernel(%arg0: i32, %arg1: memref<8x2x16xf32, #tpu.memory_space<vmem>>, %arg2: memref<99x128xf32, #tpu.memory_space<vmem>>, %arg3: memref<1x128xf32, #tpu.memory_space<vmem>>, %arg4: memref<1x32xf32, #tpu.memory_space<vmem>>, %arg5: memref<1x1xf32, #tpu.memory_space<vmem>>, %arg6: memref<2x1xf32, #tpu.memory_space<vmem>>, %arg7: memref<2x18x33xf32, #tpu.memory_space<vmem>>) attributes {dimension_semantics = [#tpu.dimension_semantics<parallel>], iteration_bounds = array<i64: 1>, scalar_prefetch = 0 : i64, scratch_operands = 1 : i64, tpu.core_type = #tpu.core_type<tc>, window_params = [{transform_indices = @transform_0, window_bounds = array<i64: 8, 2, 16>}, {pipeline_mode = #tpu.pipeline_mode<synchronous>, transform_indices = @transform_1, window_bounds = array<i64: 99, 128>}, {pipeline_mode = #tpu.pipeline_mode<synchronous>, transform_indices = @transform_2, window_bounds = array<i64: 1, 128>}, {pipeline_mode = #tpu.pipeline_mode<synchronous>, transform_indices = @transform_3, window_bounds = array<i64: 1, 32>}, {pipeline_mode = #tpu.pipeline_mode<synchronous>, transform_indices = @transform_4, window_bounds = array<i64: 1, 1>}, {transform_indices = @transform_5, window_bounds = array<i64: 2, 1>}]} {
    %cst = arith.constant 0.000000e+00 : f32
    %0 = vector.broadcast %cst : f32 to vector<2x18x33xf32>
    %c0 = arith.constant 0 : index
    %c0_0 = arith.constant 0 : index
    %c0_1 = arith.constant 0 : index
    %1 = vector.load %arg7[%c0, %c0_0, %c0_1] : memref<2x18x33xf32, #tpu.memory_space<vmem>>, vector<2x18x33xf32>
    tpu.vector_store %arg7[%c0, %c0_0, %c0_1], %0 {strides = array<i32>} : memref<2x18x33xf32, #tpu.memory_space<vmem>>, vector<2x18x33xf32>,
    %c0_2 = arith.constant 0 : index
    %c0_3 = arith.constant 0 : index
    %2 = vector.load %arg2[%c0_2, %c0_3] : memref<99x128xf32, #tpu.memory_space<vmem>>, vector<99x128xf32>
    %c0_4 = arith.constant 0 : index
    %c0_5 = arith.constant 0 : index
    %3 = vector.load %arg3[%c0_4, %c0_5] : memref<1x128xf32, #tpu.memory_space<vmem>>, vector<1x128xf32>
    %cst_6 = arith.constant 0.000000e+00 : f32
    %4 = vector.broadcast %cst_6 : f32 to vector<2x16x32xf32>
    %cst_7 = arith.constant 0.000000e+00 : f32
    %5 = vector.broadcast %cst_7 : f32 to vector<2x16x32xf32>
    %c0_i32 = arith.constant 0 : i32
    %6 = arith.index_cast %c0_i32 : i32 to index
    %c0_8 = arith.constant 0 : index
    %c0_9 = arith.constant 0 : index
    %7 = vector.load %arg1[%6, %c0_8, %c0_9] : memref<8x2x16xf32, #tpu.memory_space<vmem>>, vector<1x2x16xf32>
    %8 = vector.shape_cast %7 : vector<1x2x16xf32> to vector<2x16xf32>
    %9 = vector.shape_cast %8 : vector<2x16xf32> to vector<2x16x1xf32>
    %10 = tpu.concatenate %9, %4 in 2 : vector<2x16x1xf32>, vector<2x16x32xf32> -> vector<2x16x33xf32>
    %c0_10 = arith.constant 0 : index
    %c1 = arith.constant 1 : index
    %c0_11 = arith.constant 0 : index
    %11 = vector.load %arg7[%c0_10, %c1, %c0_11] : memref<2x18x33xf32, #tpu.memory_space<vmem>>, vector<2x16x33xf32>
    tpu.vector_store %arg7[%c0_10, %c1, %c0_11], %10 {strides = array<i32>} : memref<2x18x33xf32, #tpu.memory_space<vmem>>, vector<2x16x33xf32>,
    %c0_12 = arith.constant 0 : index
    %c0_13 = arith.constant 0 : index
    %c0_14 = arith.constant 0 : index
    %12 = vector.load %arg7[%c0_12, %c0_13, %c0_14] : memref<2x18x33xf32, #tpu.memory_space<vmem>>, vector<2x16x33xf32>
    %c0_15 = arith.constant 0 : index
    %c2 = arith.constant 2 : index
    %c0_16 = arith.constant 0 : index
    %13 = vector.load %arg7[%c0_15, %c2, %c0_16] : memref<2x18x33xf32, #tpu.memory_space<vmem>>, vector<2x16x33xf32>
    %14 = tpu.concatenate %12, %10, %13 in 2 : vector<2x16x33xf32>, vector<2x16x33xf32>, vector<2x16x33xf32> -> vector<2x16x99xf32>
    %15 = vector.shape_cast %14 : vector<2x16x99xf32> to vector<32x99xf32>
    %cst_17 = arith.constant dense<0.000000e+00> : vector<32x128xf32>
    %16 = tpu.matmul %15, %2, %cst_17 {dimension_numbers = #tpu.dot_dimension_numbers<[1], [0], [0], [1], [0, 0, 1, 1], [], []>} : vector<32x99xf32>, vector<99x128xf32>, vector<32x128xf32> -> vector<32x128xf32>
    %17 = vector.broadcast %3 : vector<1x128xf32> to vector<32x128xf32>
    %18 = arith.addf %16, %17 : vector<32x128xf32>
    %19 = tpu.iota {dimensions = array<i32: 1>} : vector<32x128xi32>
    %c96_i32 = arith.constant 96 : i32
    %20 = vector.broadcast %c96_i32 : i32 to vector<32x128xi32>
    %21 = arith.cmpi sge, %19, %20 : vector<32x128xi32>
    %22 = math.tanh %18 : vector<32x128xf32>
    %23 = arith.negf %18 : vector<32x128xf32>
    %24 = math.exp %23 : vector<32x128xf32>
    %cst_18 = arith.constant 1.000000e+00 : f32
    %25 = vector.broadcast %cst_18 : f32 to vector<32x128xf32>
    %26 = arith.addf %25, %24 : vector<32x128xf32>
    %27 = arith.divf %25, %26 : vector<32x128xf32>
    %28 = arith.select %21, %22, %27 : vector<32x128xi1>, vector<32x128xf32>
    %29 = vector.shape_cast %28 : vector<32x128xf32> to vector<2x16x128xf32>
    %30 = vector.extract_strided_slice %29 {offsets = [0, 0, 0], sizes = [2, 16, 32], strides = [1, 1, 1]} : vector<2x16x128xf32> to vector<2x16x32xf32>
    %31 = vector.extract_strided_slice %29 {offsets = [0, 0, 32], sizes = [2, 16, 32], strides = [1, 1, 1]} : vector<2x16x128xf32> to vector<2x16x32xf32>
    %32 = vector.extract_strided_slice %29 {offsets = [0, 0, 64], sizes = [2, 16, 32], strides = [1, 1, 1]} : vector<2x16x128xf32> to vector<2x16x32xf32>
    %33 = vector.extract_strided_slice %29 {offsets = [0, 0, 96], sizes = [2, 16, 32], strides = [1, 1, 1]} : vector<2x16x128xf32> to vector<2x16x32xf32>
    %34 = arith.mulf %31, %5 : vector<2x16x32xf32>
    %35 = arith.mulf %30, %33 : vector<2x16x32xf32>
    %36 = arith.addf %34, %35 : vector<2x16x32xf32>
    %37 = math.tanh %36 : vector<2x16x32xf32>
    %38 = arith.mulf %32, %37 : vector<2x16x32xf32>
    %c1_i32 = arith.constant 1 : i32
    %39 = arith.index_cast %c1_i32 : i32 to index
    %c0_19 = arith.constant 0 : index
    %c0_20 = arith.constant 0 : index
    %40 = vector.load %arg1[%39, %c0_19, %c0_20] : memref<8x2x16xf32, #tpu.memory_space<vmem>>, vector<1x2x16xf32>
    %41 = vector.shape_cast %40 : vector<1x2x16xf32> to vector<2x16xf32>
    %42 = vector.shape_cast %41 : vector<2x16xf32> to vector<2x16x1xf32>
    %43 = tpu.concatenate %42, %38 in 2 : vector<2x16x1xf32>, vector<2x16x32xf32> -> vector<2x16x33xf32>
    %c0_21 = arith.constant 0 : index
    %c1_22 = arith.constant 1 : index
    %c0_23 = arith.constant 0 : index
    %44 = vector.load %arg7[%c0_21, %c1_22, %c0_23] : memref<2x18x33xf32, #tpu.memory_space<vmem>>, vector<2x16x33xf32>
    tpu.vector_store %arg7[%c0_21, %c1_22, %c0_23], %43 {strides = array<i32>} : memref<2x18x33xf32, #tpu.memory_space<vmem>>, vector<2x16x33xf32>,
    %c0_24 = arith.constant 0 : index
    %c0_25 = arith.constant 0 : index
    %c0_26 = arith.constant 0 : index
    %45 = vector.load %arg7[%c0_24, %c0_25, %c0_26] : memref<2x18x33xf32, #tpu.memory_space<vmem>>, vector<2x16x33xf32>
    %c0_27 = arith.constant 0 : index
    %c2_28 = arith.constant 2 : index
    %c0_29 = arith.constant 0 : index
    %46 = vector.load %arg7[%c0_27, %c2_28, %c0_29] : memref<2x18x33xf32, #tpu.memory_space<vmem>>, vector<2x16x33xf32>
    %47 = tpu.concatenate %45, %43, %46 in 2 : vector<2x16x33xf32>, vector<2x16x33xf32>, vector<2x16x33xf32> -> vector<2x16x99xf32>
    %48 = vector.shape_cast %47 : vector<2x16x99xf32> to vector<32x99xf32>
    %cst_30 = arith.constant dense<0.000000e+00> : vector<32x128xf32>
    %49 = tpu.matmul %48, %2, %cst_30 {dimension_numbers = #tpu.dot_dimension_numbers<[1], [0], [0], [1], [0, 0, 1, 1], [], []>} : vector<32x99xf32>, vector<99x128xf32>, vector<32x128xf32> -> vector<32x128xf32>
    %50 = vector.broadcast %3 : vector<1x128xf32> to vector<32x128xf32>
    %51 = arith.addf %49, %50 : vector<32x128xf32>
    %52 = tpu.iota {dimensions = array<i32: 1>} : vector<32x128xi32>
    %c96_i32_31 = arith.constant 96 : i32
    %53 = vector.broadcast %c96_i32_31 : i32 to vector<32x128xi32>
    %54 = arith.cmpi sge, %52, %53 : vector<32x128xi32>
    %55 = math.tanh %51 : vector<32x128xf32>
    %56 = arith.negf %51 : vector<32x128xf32>
    %57 = math.exp %56 : vector<32x128xf32>
    %cst_32 = arith.constant 1.000000e+00 : f32
    %58 = vector.broadcast %cst_32 : f32 to vector<32x128xf32>
    %59 = arith.addf %58, %57 : vector<32x128xf32>
    %60 = arith.divf %58, %59 : vector<32x128xf32>
    %61 = arith.select %54, %55, %60 : vector<32x128xi1>, vector<32x128xf32>
    %62 = vector.shape_cast %61 : vector<32x128xf32> to vector<2x16x128xf32>
    %63 = vector.extract_strided_slice %62 {offsets = [0, 0, 0], sizes = [2, 16, 32], strides = [1, 1, 1]} : vector<2x16x128xf32> to vector<2x16x32xf32>
    %64 = vector.extract_strided_slice %62 {offsets = [0, 0, 32], sizes = [2, 16, 32], strides = [1, 1, 1]} : vector<2x16x128xf32> to vector<2x16x32xf32>
    %65 = vector.extract_strided_slice %62 {offsets = [0, 0, 64], sizes = [2, 16, 32], strides = [1, 1, 1]} : vector<2x16x128xf32> to vector<2x16x32xf32>
    %66 = vector.extract_strided_slice %62 {offsets = [0, 0, 96], sizes = [2, 16, 32], strides = [1, 1, 1]} : vector<2x16x128xf32> to vector<2x16x32xf32>
    %67 = arith.mulf %64, %36 : vector<2x16x32xf32>
    %68 = arith.mulf %63, %66 : vector<2x16x32xf32>
    %69 = arith.addf %67, %68 : vector<2x16x32xf32>
    %70 = math.tanh %69 : vector<2x16x32xf32>
    %71 = arith.mulf %65, %70 : vector<2x16x32xf32>
    %c2_i32 = arith.constant 2 : i32
    %72 = arith.index_cast %c2_i32 : i32 to index
    %c0_33 = arith.constant 0 : index
    %c0_34 = arith.constant 0 : index
    %73 = vector.load %arg1[%72, %c0_33, %c0_34] : memref<8x2x16xf32, #tpu.memory_space<vmem>>, vector<1x2x16xf32>
    %74 = vector.shape_cast %73 : vector<1x2x16xf32> to vector<2x16xf32>
    %75 = vector.shape_cast %74 : vector<2x16xf32> to vector<2x16x1xf32>
    %76 = tpu.concatenate %75, %71 in 2 : vector<2x16x1xf32>, vector<2x16x32xf32> -> vector<2x16x33xf32>
    %c0_35 = arith.constant 0 : index
    %c1_36 = arith.constant 1 : index
    %c0_37 = arith.constant 0 : index
    %77 = vector.load %arg7[%c0_35, %c1_36, %c0_37] : memref<2x18x33xf32, #tpu.memory_space<vmem>>, vector<2x16x33xf32>
    tpu.vector_store %arg7[%c0_35, %c1_36, %c0_37], %76 {strides = array<i32>} : memref<2x18x33xf32, #tpu.memory_space<vmem>>, vector<2x16x33xf32>,
    %c0_38 = arith.constant 0 : index
    %c0_39 = arith.constant 0 : index
    %c0_40 = arith.constant 0 : index
    %78 = vector.load %arg7[%c0_38, %c0_39, %c0_40] : memref<2x18x33xf32, #tpu.memory_space<vmem>>, vector<2x16x33xf32>
    %c0_41 = arith.constant 0 : index
    %c2_42 = arith.constant 2 : index
    %c0_43 = arith.constant 0 : index
    %79 = vector.load %arg7[%c0_41, %c2_42, %c0_43] : memref<2x18x33xf32, #tpu.memory_space<vmem>>, vector<2x16x33xf32>
    %80 = tpu.concatenate %78, %76, %79 in 2 : vector<2x16x33xf32>, vector<2x16x33xf32>, vector<2x16x33xf32> -> vector<2x16x99xf32>
    %81 = vector.shape_cast %80 : vector<2x16x99xf32> to vector<32x99xf32>
    %cst_44 = arith.constant dense<0.000000e+00> : vector<32x128xf32>
    %82 = tpu.matmul %81, %2, %cst_44 {dimension_numbers = #tpu.dot_dimension_numbers<[1], [0], [0], [1], [0, 0, 1, 1], [], []>} : vector<32x99xf32>, vector<99x128xf32>, vector<32x128xf32> -> vector<32x128xf32>
    %83 = vector.broadcast %3 : vector<1x128xf32> to vector<32x128xf32>
    %84 = arith.addf %82, %83 : vector<32x128xf32>
    %85 = tpu.iota {dimensions = array<i32: 1>} : vector<32x128xi32>
    %c96_i32_45 = arith.constant 96 : i32
    %86 = vector.broadcast %c96_i32_45 : i32 to vector<32x128xi32>
    %87 = arith.cmpi sge, %85, %86 : vector<32x128xi32>
    %88 = math.tanh %84 : vector<32x128xf32>
    %89 = arith.negf %84 : vector<32x128xf32>
    %90 = math.exp %89 : vector<32x128xf32>
    %cst_46 = arith.constant 1.000000e+00 : f32
    %91 = vector.broadcast %cst_46 : f32 to vector<32x128xf32>
    %92 = arith.addf %91, %90 : vector<32x128xf32>
    %93 = arith.divf %91, %92 : vector<32x128xf32>
    %94 = arith.select %87, %88, %93 : vector<32x128xi1>, vector<32x128xf32>
    %95 = vector.shape_cast %94 : vector<32x128xf32> to vector<2x16x128xf32>
    %96 = vector.extract_strided_slice %95 {offsets = [0, 0, 0], sizes = [2, 16, 32], strides = [1, 1, 1]} : vector<2x16x128xf32> to vector<2x16x32xf32>
    %97 = vector.extract_strided_slice %95 {offsets = [0, 0, 32], sizes = [2, 16, 32], strides = [1, 1, 1]} : vector<2x16x128xf32> to vector<2x16x32xf32>
    %98 = vector.extract_strided_slice %95 {offsets = [0, 0, 64], sizes = [2, 16, 32], strides = [1, 1, 1]} : vector<2x16x128xf32> to vector<2x16x32xf32>
    %99 = vector.extract_strided_slice %95 {offsets = [0, 0, 96], sizes = [2, 16, 32], strides = [1, 1, 1]} : vector<2x16x128xf32> to vector<2x16x32xf32>
    %100 = arith.mulf %97, %69 : vector<2x16x32xf32>
    %101 = arith.mulf %96, %99 : vector<2x16x32xf32>
    %102 = arith.addf %100, %101 : vector<2x16x32xf32>
    %103 = math.tanh %102 : vector<2x16x32xf32>
    %104 = arith.mulf %98, %103 : vector<2x16x32xf32>
    %c3_i32 = arith.constant 3 : i32
    %105 = arith.index_cast %c3_i32 : i32 to index
    %c0_47 = arith.constant 0 : index
    %c0_48 = arith.constant 0 : index
    %106 = vector.load %arg1[%105, %c0_47, %c0_48] : memref<8x2x16xf32, #tpu.memory_space<vmem>>, vector<1x2x16xf32>
    %107 = vector.shape_cast %106 : vector<1x2x16xf32> to vector<2x16xf32>
    %108 = vector.shape_cast %107 : vector<2x16xf32> to vector<2x16x1xf32>
    %109 = tpu.concatenate %108, %104 in 2 : vector<2x16x1xf32>, vector<2x16x32xf32> -> vector<2x16x33xf32>
    %c0_49 = arith.constant 0 : index
    %c1_50 = arith.constant 1 : index
    %c0_51 = arith.constant 0 : index
    %110 = vector.load %arg7[%c0_49, %c1_50, %c0_51] : memref<2x18x33xf32, #tpu.memory_space<vmem>>, vector<2x16x33xf32>
    tpu.vector_store %arg7[%c0_49, %c1_50, %c0_51], %109 {strides = array<i32>} : memref<2x18x33xf32, #tpu.memory_space<vmem>>, vector<2x16x33xf32>,
    %c0_52 = arith.constant 0 : index
    %c0_53 = arith.constant 0 : index
    %c0_54 = arith.constant 0 : index
    %111 = vector.load %arg7[%c0_52, %c0_53, %c0_54] : memref<2x18x33xf32, #tpu.memory_space<vmem>>, vector<2x16x33xf32>
    %c0_55 = arith.constant 0 : index
    %c2_56 = arith.constant 2 : index
    %c0_57 = arith.constant 0 : index
    %112 = vector.load %arg7[%c0_55, %c2_56, %c0_57] : memref<2x18x33xf32, #tpu.memory_space<vmem>>, vector<2x16x33xf32>
    %113 = tpu.concatenate %111, %109, %112 in 2 : vector<2x16x33xf32>, vector<2x16x33xf32>, vector<2x16x33xf32> -> vector<2x16x99xf32>
    %114 = vector.shape_cast %113 : vector<2x16x99xf32> to vector<32x99xf32>
    %cst_58 = arith.constant dense<0.000000e+00> : vector<32x128xf32>
    %115 = tpu.matmul %114, %2, %cst_58 {dimension_numbers = #tpu.dot_dimension_numbers<[1], [0], [0], [1], [0, 0, 1, 1], [], []>} : vector<32x99xf32>, vector<99x128xf32>, vector<32x128xf32> -> vector<32x128xf32>
    %116 = vector.broadcast %3 : vector<1x128xf32> to vector<32x128xf32>
    %117 = arith.addf %115, %116 : vector<32x128xf32>
    %118 = tpu.iota {dimensions = array<i32: 1>} : vector<32x128xi32>
    %c96_i32_59 = arith.constant 96 : i32
    %119 = vector.broadcast %c96_i32_59 : i32 to vector<32x128xi32>
    %120 = arith.cmpi sge, %118, %119 : vector<32x128xi32>
    %121 = math.tanh %117 : vector<32x128xf32>
    %122 = arith.negf %117 : vector<32x128xf32>
    %123 = math.exp %122 : vector<32x128xf32>
    %cst_60 = arith.constant 1.000000e+00 : f32
    %124 = vector.broadcast %cst_60 : f32 to vector<32x128xf32>
    %125 = arith.addf %124, %123 : vector<32x128xf32>
    %126 = arith.divf %124, %125 : vector<32x128xf32>
    %127 = arith.select %120, %121, %126 : vector<32x128xi1>, vector<32x128xf32>
    %128 = vector.shape_cast %127 : vector<32x128xf32> to vector<2x16x128xf32>
    %129 = vector.extract_strided_slice %128 {offsets = [0, 0, 0], sizes = [2, 16, 32], strides = [1, 1, 1]} : vector<2x16x128xf32> to vector<2x16x32xf32>
    %130 = vector.extract_strided_slice %128 {offsets = [0, 0, 32], sizes = [2, 16, 32], strides = [1, 1, 1]} : vector<2x16x128xf32> to vector<2x16x32xf32>
    %131 = vector.extract_strided_slice %128 {offsets = [0, 0, 64], sizes = [2, 16, 32], strides = [1, 1, 1]} : vector<2x16x128xf32> to vector<2x16x32xf32>
    %132 = vector.extract_strided_slice %128 {offsets = [0, 0, 96], sizes = [2, 16, 32], strides = [1, 1, 1]} : vector<2x16x128xf32> to vector<2x16x32xf32>
    %133 = arith.mulf %130, %102 : vector<2x16x32xf32>
    %134 = arith.mulf %129, %132 : vector<2x16x32xf32>
    %135 = arith.addf %133, %134 : vector<2x16x32xf32>
    %136 = math.tanh %135 : vector<2x16x32xf32>
    %137 = arith.mulf %131, %136 : vector<2x16x32xf32>
    %c4_i32 = arith.constant 4 : i32
    %138 = arith.index_cast %c4_i32 : i32 to index
    %c0_61 = arith.constant 0 : index
    %c0_62 = arith.constant 0 : index
    %139 = vector.load %arg1[%138, %c0_61, %c0_62] : memref<8x2x16xf32, #tpu.memory_space<vmem>>, vector<1x2x16xf32>
    %140 = vector.shape_cast %139 : vector<1x2x16xf32> to vector<2x16xf32>
    %141 = vector.shape_cast %140 : vector<2x16xf32> to vector<2x16x1xf32>
    %142 = tpu.concatenate %141, %137 in 2 : vector<2x16x1xf32>, vector<2x16x32xf32> -> vector<2x16x33xf32>
    %c0_63 = arith.constant 0 : index
    %c1_64 = arith.constant 1 : index
    %c0_65 = arith.constant 0 : index
    %143 = vector.load %arg7[%c0_63, %c1_64, %c0_65] : memref<2x18x33xf32, #tpu.memory_space<vmem>>, vector<2x16x33xf32>
    tpu.vector_store %arg7[%c0_63, %c1_64, %c0_65], %142 {strides = array<i32>} : memref<2x18x33xf32, #tpu.memory_space<vmem>>, vector<2x16x33xf32>,
    %c0_66 = arith.constant 0 : index
    %c0_67 = arith.constant 0 : index
    %c0_68 = arith.constant 0 : index
    %144 = vector.load %arg7[%c0_66, %c0_67, %c0_68] : memref<2x18x33xf32, #tpu.memory_space<vmem>>, vector<2x16x33xf32>
    %c0_69 = arith.constant 0 : index
    %c2_70 = arith.constant 2 : index
    %c0_71 = arith.constant 0 : index
    %145 = vector.load %arg7[%c0_69, %c2_70, %c0_71] : memref<2x18x33xf32, #tpu.memory_space<vmem>>, vector<2x16x33xf32>
    %146 = tpu.concatenate %144, %142, %145 in 2 : vector<2x16x33xf32>, vector<2x16x33xf32>, vector<2x16x33xf32> -> vector<2x16x99xf32>
    %147 = vector.shape_cast %146 : vector<2x16x99xf32> to vector<32x99xf32>
    %cst_72 = arith.constant dense<0.000000e+00> : vector<32x128xf32>
    %148 = tpu.matmul %147, %2, %cst_72 {dimension_numbers = #tpu.dot_dimension_numbers<[1], [0], [0], [1], [0, 0, 1, 1], [], []>} : vector<32x99xf32>, vector<99x128xf32>, vector<32x128xf32> -> vector<32x128xf32>
    %149 = vector.broadcast %3 : vector<1x128xf32> to vector<32x128xf32>
    %150 = arith.addf %148, %149 : vector<32x128xf32>
    %151 = tpu.iota {dimensions = array<i32: 1>} : vector<32x128xi32>
    %c96_i32_73 = arith.constant 96 : i32
    %152 = vector.broadcast %c96_i32_73 : i32 to vector<32x128xi32>
    %153 = arith.cmpi sge, %151, %152 : vector<32x128xi32>
    %154 = math.tanh %150 : vector<32x128xf32>
    %155 = arith.negf %150 : vector<32x128xf32>
    %156 = math.exp %155 : vector<32x128xf32>
    %cst_74 = arith.constant 1.000000e+00 : f32
    %157 = vector.broadcast %cst_74 : f32 to vector<32x128xf32>
    %158 = arith.addf %157, %156 : vector<32x128xf32>
    %159 = arith.divf %157, %158 : vector<32x128xf32>
    %160 = arith.select %153, %154, %159 : vector<32x128xi1>, vector<32x128xf32>
    %161 = vector.shape_cast %160 : vector<32x128xf32> to vector<2x16x128xf32>
    %162 = vector.extract_strided_slice %161 {offsets = [0, 0, 0], sizes = [2, 16, 32], strides = [1, 1, 1]} : vector<2x16x128xf32> to vector<2x16x32xf32>
    %163 = vector.extract_strided_slice %161 {offsets = [0, 0, 32], sizes = [2, 16, 32], strides = [1, 1, 1]} : vector<2x16x128xf32> to vector<2x16x32xf32>
    %164 = vector.extract_strided_slice %161 {offsets = [0, 0, 64], sizes = [2, 16, 32], strides = [1, 1, 1]} : vector<2x16x128xf32> to vector<2x16x32xf32>
    %165 = vector.extract_strided_slice %161 {offsets = [0, 0, 96], sizes = [2, 16, 32], strides = [1, 1, 1]} : vector<2x16x128xf32> to vector<2x16x32xf32>
    %166 = arith.mulf %163, %135 : vector<2x16x32xf32>
    %167 = arith.mulf %162, %165 : vector<2x16x32xf32>
    %168 = arith.addf %166, %167 : vector<2x16x32xf32>
    %169 = math.tanh %168 : vector<2x16x32xf32>
    %170 = arith.mulf %164, %169 : vector<2x16x32xf32>
    %c5_i32 = arith.constant 5 : i32
    %171 = arith.index_cast %c5_i32 : i32 to index
    %c0_75 = arith.constant 0 : index
    %c0_76 = arith.constant 0 : index
    %172 = vector.load %arg1[%171, %c0_75, %c0_76] : memref<8x2x16xf32, #tpu.memory_space<vmem>>, vector<1x2x16xf32>
    %173 = vector.shape_cast %172 : vector<1x2x16xf32> to vector<2x16xf32>
    %174 = vector.shape_cast %173 : vector<2x16xf32> to vector<2x16x1xf32>
    %175 = tpu.concatenate %174, %170 in 2 : vector<2x16x1xf32>, vector<2x16x32xf32> -> vector<2x16x33xf32>
    %c0_77 = arith.constant 0 : index
    %c1_78 = arith.constant 1 : index
    %c0_79 = arith.constant 0 : index
    %176 = vector.load %arg7[%c0_77, %c1_78, %c0_79] : memref<2x18x33xf32, #tpu.memory_space<vmem>>, vector<2x16x33xf32>
    tpu.vector_store %arg7[%c0_77, %c1_78, %c0_79], %175 {strides = array<i32>} : memref<2x18x33xf32, #tpu.memory_space<vmem>>, vector<2x16x33xf32>,
    %c0_80 = arith.constant 0 : index
    %c0_81 = arith.constant 0 : index
    %c0_82 = arith.constant 0 : index
    %177 = vector.load %arg7[%c0_80, %c0_81, %c0_82] : memref<2x18x33xf32, #tpu.memory_space<vmem>>, vector<2x16x33xf32>
    %c0_83 = arith.constant 0 : index
    %c2_84 = arith.constant 2 : index
    %c0_85 = arith.constant 0 : index
    %178 = vector.load %arg7[%c0_83, %c2_84, %c0_85] : memref<2x18x33xf32, #tpu.memory_space<vmem>>, vector<2x16x33xf32>
    %179 = tpu.concatenate %177, %175, %178 in 2 : vector<2x16x33xf32>, vector<2x16x33xf32>, vector<2x16x33xf32> -> vector<2x16x99xf32>
    %180 = vector.shape_cast %179 : vector<2x16x99xf32> to vector<32x99xf32>
    %cst_86 = arith.constant dense<0.000000e+00> : vector<32x128xf32>
    %181 = tpu.matmul %180, %2, %cst_86 {dimension_numbers = #tpu.dot_dimension_numbers<[1], [0], [0], [1], [0, 0, 1, 1], [], []>} : vector<32x99xf32>, vector<99x128xf32>, vector<32x128xf32> -> vector<32x128xf32>
    %182 = vector.broadcast %3 : vector<1x128xf32> to vector<32x128xf32>
    %183 = arith.addf %181, %182 : vector<32x128xf32>
    %184 = tpu.iota {dimensions = array<i32: 1>} : vector<32x128xi32>
    %c96_i32_87 = arith.constant 96 : i32
    %185 = vector.broadcast %c96_i32_87 : i32 to vector<32x128xi32>
    %186 = arith.cmpi sge, %184, %185 : vector<32x128xi32>
    %187 = math.tanh %183 : vector<32x128xf32>
    %188 = arith.negf %183 : vector<32x128xf32>
    %189 = math.exp %188 : vector<32x128xf32>
    %cst_88 = arith.constant 1.000000e+00 : f32
    %190 = vector.broadcast %cst_88 : f32 to vector<32x128xf32>
    %191 = arith.addf %190, %189 : vector<32x128xf32>
    %192 = arith.divf %190, %191 : vector<32x128xf32>
    %193 = arith.select %186, %187, %192 : vector<32x128xi1>, vector<32x128xf32>
    %194 = vector.shape_cast %193 : vector<32x128xf32> to vector<2x16x128xf32>
    %195 = vector.extract_strided_slice %194 {offsets = [0, 0, 0], sizes = [2, 16, 32], strides = [1, 1, 1]} : vector<2x16x128xf32> to vector<2x16x32xf32>
    %196 = vector.extract_strided_slice %194 {offsets = [0, 0, 32], sizes = [2, 16, 32], strides = [1, 1, 1]} : vector<2x16x128xf32> to vector<2x16x32xf32>
    %197 = vector.extract_strided_slice %194 {offsets = [0, 0, 64], sizes = [2, 16, 32], strides = [1, 1, 1]} : vector<2x16x128xf32> to vector<2x16x32xf32>
    %198 = vector.extract_strided_slice %194 {offsets = [0, 0, 96], sizes = [2, 16, 32], strides = [1, 1, 1]} : vector<2x16x128xf32> to vector<2x16x32xf32>
    %199 = arith.mulf %196, %168 : vector<2x16x32xf32>
    %200 = arith.mulf %195, %198 : vector<2x16x32xf32>
    %201 = arith.addf %199, %200 : vector<2x16x32xf32>
    %202 = math.tanh %201 : vector<2x16x32xf32>
    %203 = arith.mulf %197, %202 : vector<2x16x32xf32>
    %c6_i32 = arith.constant 6 : i32
    %204 = arith.index_cast %c6_i32 : i32 to index
    %c0_89 = arith.constant 0 : index
    %c0_90 = arith.constant 0 : index
    %205 = vector.load %arg1[%204, %c0_89, %c0_90] : memref<8x2x16xf32, #tpu.memory_space<vmem>>, vector<1x2x16xf32>
    %206 = vector.shape_cast %205 : vector<1x2x16xf32> to vector<2x16xf32>
    %207 = vector.shape_cast %206 : vector<2x16xf32> to vector<2x16x1xf32>
    %208 = tpu.concatenate %207, %203 in 2 : vector<2x16x1xf32>, vector<2x16x32xf32> -> vector<2x16x33xf32>
    %c0_91 = arith.constant 0 : index
    %c1_92 = arith.constant 1 : index
    %c0_93 = arith.constant 0 : index
    %209 = vector.load %arg7[%c0_91, %c1_92, %c0_93] : memref<2x18x33xf32, #tpu.memory_space<vmem>>, vector<2x16x33xf32>
    tpu.vector_store %arg7[%c0_91, %c1_92, %c0_93], %208 {strides = array<i32>} : memref<2x18x33xf32, #tpu.memory_space<vmem>>, vector<2x16x33xf32>,
    %c0_94 = arith.constant 0 : index
    %c0_95 = arith.constant 0 : index
    %c0_96 = arith.constant 0 : index
    %210 = vector.load %arg7[%c0_94, %c0_95, %c0_96] : memref<2x18x33xf32, #tpu.memory_space<vmem>>, vector<2x16x33xf32>
    %c0_97 = arith.constant 0 : index
    %c2_98 = arith.constant 2 : index
    %c0_99 = arith.constant 0 : index
    %211 = vector.load %arg7[%c0_97, %c2_98, %c0_99] : memref<2x18x33xf32, #tpu.memory_space<vmem>>, vector<2x16x33xf32>
    %212 = tpu.concatenate %210, %208, %211 in 2 : vector<2x16x33xf32>, vector<2x16x33xf32>, vector<2x16x33xf32> -> vector<2x16x99xf32>
    %213 = vector.shape_cast %212 : vector<2x16x99xf32> to vector<32x99xf32>
    %cst_100 = arith.constant dense<0.000000e+00> : vector<32x128xf32>
    %214 = tpu.matmul %213, %2, %cst_100 {dimension_numbers = #tpu.dot_dimension_numbers<[1], [0], [0], [1], [0, 0, 1, 1], [], []>} : vector<32x99xf32>, vector<99x128xf32>, vector<32x128xf32> -> vector<32x128xf32>
    %215 = vector.broadcast %3 : vector<1x128xf32> to vector<32x128xf32>
    %216 = arith.addf %214, %215 : vector<32x128xf32>
    %217 = tpu.iota {dimensions = array<i32: 1>} : vector<32x128xi32>
    %c96_i32_101 = arith.constant 96 : i32
    %218 = vector.broadcast %c96_i32_101 : i32 to vector<32x128xi32>
    %219 = arith.cmpi sge, %217, %218 : vector<32x128xi32>
    %220 = math.tanh %216 : vector<32x128xf32>
    %221 = arith.negf %216 : vector<32x128xf32>
    %222 = math.exp %221 : vector<32x128xf32>
    %cst_102 = arith.constant 1.000000e+00 : f32
    %223 = vector.broadcast %cst_102 : f32 to vector<32x128xf32>
    %224 = arith.addf %223, %222 : vector<32x128xf32>
    %225 = arith.divf %223, %224 : vector<32x128xf32>
    %226 = arith.select %219, %220, %225 : vector<32x128xi1>, vector<32x128xf32>
    %227 = vector.shape_cast %226 : vector<32x128xf32> to vector<2x16x128xf32>
    %228 = vector.extract_strided_slice %227 {offsets = [0, 0, 0], sizes = [2, 16, 32], strides = [1, 1, 1]} : vector<2x16x128xf32> to vector<2x16x32xf32>
    %229 = vector.extract_strided_slice %227 {offsets = [0, 0, 32], sizes = [2, 16, 32], strides = [1, 1, 1]} : vector<2x16x128xf32> to vector<2x16x32xf32>
    %230 = vector.extract_strided_slice %227 {offsets = [0, 0, 64], sizes = [2, 16, 32], strides = [1, 1, 1]} : vector<2x16x128xf32> to vector<2x16x32xf32>
    %231 = vector.extract_strided_slice %227 {offsets = [0, 0, 96], sizes = [2, 16, 32], strides = [1, 1, 1]} : vector<2x16x128xf32> to vector<2x16x32xf32>
    %232 = arith.mulf %229, %201 : vector<2x16x32xf32>
    %233 = arith.mulf %228, %231 : vector<2x16x32xf32>
    %234 = arith.addf %232, %233 : vector<2x16x32xf32>
    %235 = math.tanh %234 : vector<2x16x32xf32>
    %236 = arith.mulf %230, %235 : vector<2x16x32xf32>
    %c7_i32 = arith.constant 7 : i32
    %237 = arith.index_cast %c7_i32 : i32 to index
    %c0_103 = arith.constant 0 : index
    %c0_104 = arith.constant 0 : index
    %238 = vector.load %arg1[%237, %c0_103, %c0_104] : memref<8x2x16xf32, #tpu.memory_space<vmem>>, vector<1x2x16xf32>
    %239 = vector.shape_cast %238 : vector<1x2x16xf32> to vector<2x16xf32>
    %240 = vector.shape_cast %239 : vector<2x16xf32> to vector<2x16x1xf32>
    %241 = tpu.concatenate %240, %236 in 2 : vector<2x16x1xf32>, vector<2x16x32xf32> -> vector<2x16x33xf32>
    %c0_105 = arith.constant 0 : index
    %c1_106 = arith.constant 1 : index
    %c0_107 = arith.constant 0 : index
    %242 = vector.load %arg7[%c0_105, %c1_106, %c0_107] : memref<2x18x33xf32, #tpu.memory_space<vmem>>, vector<2x16x33xf32>
    tpu.vector_store %arg7[%c0_105, %c1_106, %c0_107], %241 {strides = array<i32>} : memref<2x18x33xf32, #tpu.memory_space<vmem>>, vector<2x16x33xf32>,
    %c0_108 = arith.constant 0 : index
    %c0_109 = arith.constant 0 : index
    %c0_110 = arith.constant 0 : index
    %243 = vector.load %arg7[%c0_108, %c0_109, %c0_110] : memref<2x18x33xf32, #tpu.memory_space<vmem>>, vector<2x16x33xf32>
    %c0_111 = arith.constant 0 : index
    %c2_112 = arith.constant 2 : index
    %c0_113 = arith.constant 0 : index
    %244 = vector.load %arg7[%c0_111, %c2_112, %c0_113] : memref<2x18x33xf32, #tpu.memory_space<vmem>>, vector<2x16x33xf32>
    %245 = tpu.concatenate %243, %241, %244 in 2 : vector<2x16x33xf32>, vector<2x16x33xf32>, vector<2x16x33xf32> -> vector<2x16x99xf32>
    %246 = vector.shape_cast %245 : vector<2x16x99xf32> to vector<32x99xf32>
    %cst_114 = arith.constant dense<0.000000e+00> : vector<32x128xf32>
    %247 = tpu.matmul %246, %2, %cst_114 {dimension_numbers = #tpu.dot_dimension_numbers<[1], [0], [0], [1], [0, 0, 1, 1], [], []>} : vector<32x99xf32>, vector<99x128xf32>, vector<32x128xf32> -> vector<32x128xf32>
    %248 = vector.broadcast %3 : vector<1x128xf32> to vector<32x128xf32>
    %249 = arith.addf %247, %248 : vector<32x128xf32>
    %250 = tpu.iota {dimensions = array<i32: 1>} : vector<32x128xi32>
    %c96_i32_115 = arith.constant 96 : i32
    %251 = vector.broadcast %c96_i32_115 : i32 to vector<32x128xi32>
    %252 = arith.cmpi sge, %250, %251 : vector<32x128xi32>
    %253 = math.tanh %249 : vector<32x128xf32>
    %254 = arith.negf %249 : vector<32x128xf32>
    %255 = math.exp %254 : vector<32x128xf32>
    %cst_116 = arith.constant 1.000000e+00 : f32
    %256 = vector.broadcast %cst_116 : f32 to vector<32x128xf32>
    %257 = arith.addf %256, %255 : vector<32x128xf32>
    %258 = arith.divf %256, %257 : vector<32x128xf32>
    %259 = arith.select %252, %253, %258 : vector<32x128xi1>, vector<32x128xf32>
    %260 = vector.shape_cast %259 : vector<32x128xf32> to vector<2x16x128xf32>
    %261 = vector.extract_strided_slice %260 {offsets = [0, 0, 0], sizes = [2, 16, 32], strides = [1, 1, 1]} : vector<2x16x128xf32> to vector<2x16x32xf32>
    %262 = vector.extract_strided_slice %260 {offsets = [0, 0, 32], sizes = [2, 16, 32], strides = [1, 1, 1]} : vector<2x16x128xf32> to vector<2x16x32xf32>
    %263 = vector.extract_strided_slice %260 {offsets = [0, 0, 64], sizes = [2, 16, 32], strides = [1, 1, 1]} : vector<2x16x128xf32> to vector<2x16x32xf32>
    %264 = vector.extract_strided_slice %260 {offsets = [0, 0, 96], sizes = [2, 16, 32], strides = [1, 1, 1]} : vector<2x16x128xf32> to vector<2x16x32xf32>
    %265 = arith.mulf %262, %234 : vector<2x16x32xf32>
    %266 = arith.mulf %261, %264 : vector<2x16x32xf32>
    %267 = arith.addf %265, %266 : vector<2x16x32xf32>
    %268 = math.tanh %267 : vector<2x16x32xf32>
    %269 = arith.mulf %263, %268 : vector<2x16x32xf32>
    %c8_i32 = arith.constant 8 : i32
    %cst_117 = arith.constant dense<0.000000e+00> : vector<2x32xf32>
    %270 = vector.multi_reduction <add>, %269, %cst_117 [1] : vector<2x16x32xf32> to vector<2x32xf32>
    %cst_118 = arith.constant 6.250000e-02 : f32
    %271 = vector.broadcast %cst_118 : f32 to vector<2x32xf32>
    %272 = arith.mulf %270, %271 : vector<2x32xf32>
    %c0_119 = arith.constant 0 : index
    %c0_120 = arith.constant 0 : index
    %273 = vector.load %arg4[%c0_119, %c0_120] : memref<1x32xf32, #tpu.memory_space<vmem>>, vector<1x32xf32>
    %274 = vector.broadcast %273 : vector<1x32xf32> to vector<2x32xf32>
    %275 = arith.mulf %272, %274 : vector<2x32xf32>
    %cst_121 = arith.constant dense<0.000000e+00> : vector<2xf32>
    %276 = vector.multi_reduction <add>, %275, %cst_121 [1] : vector<2x32xf32> to vector<2xf32>
    %277 = vector.shape_cast %276 : vector<2xf32> to vector<2x1xf32>
    %c0_122 = arith.constant 0 : index
    %c0_123 = arith.constant 0 : index
    %278 = vector.load %arg5[%c0_122, %c0_123] : memref<1x1xf32, #tpu.memory_space<vmem>>, vector<1x1xf32>
    %279 = vector.broadcast %278 : vector<1x1xf32> to vector<2x1xf32>
    %280 = arith.addf %277, %279 : vector<2x1xf32>
    %c0_124 = arith.constant 0 : index
    %c0_125 = arith.constant 0 : index
    %281 = vector.load %arg6[%c0_124, %c0_125] : memref<2x1xf32, #tpu.memory_space<vmem>>, vector<2x1xf32>
    tpu.vector_store %arg6[%c0_124, %c0_125], %280 {strides = array<i32>} : memref<2x1xf32, #tpu.memory_space<vmem>>, vector<2x1xf32>,
    return
  }
  func.func @transform_0(%arg0: i32) -> (i32, i32, i32) {
    %c0_i32 = arith.constant 0 : i32
    %c0_i32_0 = arith.constant 0 : i32
    %c0_i32_1 = arith.constant 0 : i32
    return %c0_i32, %arg0, %c0_i32_0 : i32, i32, i32
  }
  func.func @transform_1(%arg0: i32) -> (i32, i32) {
    %c0_i32 = arith.constant 0 : i32
    %c0_i32_0 = arith.constant 0 : i32
    %c0_i32_1 = arith.constant 0 : i32
    return %c0_i32, %c0_i32_0 : i32, i32
  }
  func.func @transform_2(%arg0: i32) -> (i32, i32) {
    %c0_i32 = arith.constant 0 : i32
    %c0_i32_0 = arith.constant 0 : i32
    %c0_i32_1 = arith.constant 0 : i32
    return %c0_i32, %c0_i32_0 : i32, i32
  }
  func.func @transform_3(%arg0: i32) -> (i32, i32) {
    %c0_i32 = arith.constant 0 : i32
    %c0_i32_0 = arith.constant 0 : i32
    %c0_i32_1 = arith.constant 0 : i32
    return %c0_i32, %c0_i32_0 : i32, i32
  }
  func.func @transform_4(%arg0: i32) -> (i32, i32) {
    %c0_i32 = arith.constant 0 : i32
    %c0_i32_0 = arith.constant 0 : i32
    %c0_i32_1 = arith.constant 0 : i32
    return %c0_i32, %c0_i32_0 : i32, i32
  }
  func.func @transform_5(%arg0: i32) -> (i32, i32) {
    %c0_i32 = arith.constant 0 : i32
    %c0_i32_0 = arith.constant 0 : i32
    return %arg0, %c0_i32 : i32, i32
  }
}

</mosaic_0001>

<llo_original>
// kernel: tpu_custom_call.1
$region0: #{tpu_custom_call.1}
  #allocation0 [shape = 'u32[]', space=smem, size = 0x4, offset = 0x4, fixed_abs, tag = 'smem constant byte address 0x4 - core index']
  #allocation1 [shape = 'u32[72,128]{1,0:T(1,128)}', space=vmem, size = 0x9000, scoped, tag = 'internal scratch']
  #allocation2 [shape = 'f32[2,18,33]{2,1,0:T(8,128)}', space=vmem, size = 0x6000, scoped, tag = 'scratch operand']
  #allocation3 [shape = 'f32[1,1]{1,0:T(1,128)S(1)}', space=vmem, size = 0x200, scoped, tag = 'scoped memory for tpu_custom_call.1']
  %s0 = inlined_call_operand.hbm [shape: f32[8,2,16], index: 0, kind: input, shape index: {}]
  %s1 = inlined_call_operand.hbm [shape: f32[99,128], index: 1, kind: input, shape index: {}]
  %s2 = inlined_call_operand.vmem [shape: f32[1,128], index: 2, kind: input, shape index: {}]
  %s3 = inlined_call_operand.vmem [shape: f32[1,32], index: 3, kind: input, shape index: {}]
  %s4 = inlined_call_operand.<no memory space> [shape: f32[1,1], index: 4, kind: input, shape index: {}]
  %s5 = inlined_call_operand.vmem [shape: f32[2,1], index: 5, kind: output, shape index: {}]
  %s6 = sld [smem:[#allocation0]]
  $region38: #{tpu_custom_call.1} parent=0
    _
  %s8 = ssub.s32 1, %s6
  %s9 = scalar_select 0, %s8, %s6
  %v10 = vstv %s4
  %11 = vst [vmem:[#allocation3] sm:$0x1] %v10
  $region1: #{tpu_custom_call.1} parent=0
    #allocation4 [shape = 'u8[8192]{0}', space=vmem, size = 0x2000, scoped, tag = 'input window, operand 0, single buffered']
    #allocation5 [shape = 's32[1]{0}', space=sflag, size = 0x4, scoped, tag = 'scoped memory for tpu_custom_call.1']
    #allocation6 [shape = 'u8[53248]{0}', space=vmem, size = 0xd000, scoped, tag = 'input window, operand 1, single buffered']
    #allocation7 [shape = 's32[1]{0}', space=sflag, size = 0x4, scoped, tag = 'scoped memory for tpu_custom_call.1']
    %12 = vsyncpa [#allocation5], 0
    %13 = vsyncpa [#allocation7], 0
    // Predicated region
    $region2: #{tpu_custom_call.1} parent=1 // pred_check
      _
    $region3: #{tpu_custom_call.1} parent=1 // pred_check_branch
      %15 = sbr.rel (0) target = $region5
    $region4: #{tpu_custom_call.1} parent=1 // pred_region
      %17 = vsyncadd [#allocation5], 0
      %s18 = sshll.u32 %s0, 4
      %s19 = int_to_ptr.hbm [resolvable:$true] %s18
      %s20 = sshll.u32 [#allocation4], 4
      %s21 = int_to_ptr.vmem [resolvable:$true] %s20
      %26 = dma.hbm_to_vmem [thread:$0]  %s19, 256, %s21, [#allocation5], 32, 32, 2
    $region5: #{tpu_custom_call.1} parent=1 // pred_fallthru
      _
    // Predicated region
    $region6: #{tpu_custom_call.1} parent=1 // pred_check
      _
    $region7: #{tpu_custom_call.1} parent=1 // pred_check_branch
      %28 = sbr.rel (0) target = $region9
    $region8: #{tpu_custom_call.1} parent=1 // pred_region
      %30 = vsyncadd [#allocation7], 0
      %s31 = sshll.u32 %s1, 4
      %s32 = int_to_ptr.hbm [resolvable:$true] %s31
      %s33 = sshll.u32 [#allocation6], 4
      %s34 = int_to_ptr.vmem [resolvable:$true] %s33
      %39 = dma.hbm_to_vmem [thread:$0]  %s32, 1664, %s34, [#allocation7], 128, 128, 8
    $region9: #{tpu_custom_call.1} parent=1 // pred_fallthru
      _
    // Predicated region
    $region10: #{tpu_custom_call.1} parent=1 // pred_check
      _
    $region11: #{tpu_custom_call.1} parent=1 // pred_check_branch
      %41 = sbr.rel (0) target = $region13
    $region12: #{tpu_custom_call.1} parent=1 // pred_region
      _
    $region13: #{tpu_custom_call.1} parent=1 // pred_fallthru
      _
    // Predicated region
    $region14: #{tpu_custom_call.1} parent=1 // pred_check
      _
    $region15: #{tpu_custom_call.1} parent=1 // pred_check_branch
      %43 = sbr.rel (0) target = $region17
    $region16: #{tpu_custom_call.1} parent=1 // pred_region
      _
    $region17: #{tpu_custom_call.1} parent=1 // pred_fallthru
      _
    // Predicated region
    $region18: #{tpu_custom_call.1} parent=1 // pred_check
      _
    $region19: #{tpu_custom_call.1} parent=1 // pred_check_branch
      %45 = sbr.rel (0) target = $region21
    $region20: #{tpu_custom_call.1} parent=1 // pred_region
      _
    $region21: #{tpu_custom_call.1} parent=1 // pred_fallthru
      _
    // Predicated region
    $region22: #{tpu_custom_call.1} parent=1 // pred_check
      _
    $region23: #{tpu_custom_call.1} parent=1 // pred_check_branch
      %47 = sbr.rel (0) target = $region25
    $region24: #{tpu_custom_call.1} parent=1 // pred_region
      %49 = dma.done [#allocation5], 256
    $region25: #{tpu_custom_call.1} parent=1 // pred_fallthru
      _
    // Predicated region
    $region26: #{tpu_custom_call.1} parent=1 // pred_check
      _
    $region27: #{tpu_custom_call.1} parent=1 // pred_check_branch
      %51 = sbr.rel (0) target = $region29
    $region28: #{tpu_custom_call.1} parent=1 // pred_region
      %53 = dma.done [#allocation7], 1664
    $region29: #{tpu_custom_call.1} parent=1 // pred_fallthru
      _
    %vm54 = vcmask 269312
    %55 = vst.msk [vmem:[#allocation2] sm:$0xff] %vm54, 0.0
    %56 = vst.msk [vmem:[#allocation2 + $0x8] sm:$0xff] %vm54, 0.0
    %vm57 = vcmask 263168
    %58 = vst.msk [vmem:[#allocation2 + $0x10] sm:$0x3] %vm57, 0.0
    %59 = vst.msk [vmem:[#allocation2 + $0x18] sm:$0xff] %vm54, 0.0
    %60 = vst.msk [vmem:[#allocation2 + $0x20] sm:$0xff] %vm54, 0.0
    %61 = vst.msk [vmem:[#allocation2 + $0x28] sm:$0x3] %vm57, 0.0
    %v62 = vld [vmem:[#allocation6] sm:$0xff]
    %v63 = vld [vmem:[#allocation6 + $0x8] sm:$0xff]
    %v64 = vld [vmem:[#allocation6 + $0x10] sm:$0xff]
    %v65 = vld [vmem:[#allocation6 + $0x18] sm:$0xff]
    %v66 = vld [vmem:[#allocation6 + $0x20] sm:$0xff]
    %v67 = vld [vmem:[#allocation6 + $0x28] sm:$0xff]
    %v68 = vld [vmem:[#allocation6 + $0x30] sm:$0xff]
    %v69 = vld [vmem:[#allocation6 + $0x38] sm:$0xff]
    %v70 = vld [vmem:[#allocation6 + $0x40] sm:$0xff]
    %v71 = vld [vmem:[#allocation6 + $0x48] sm:$0xff]
    %v72 = vld [vmem:[#allocation6 + $0x50] sm:$0xff]
    %v73 = vld [vmem:[#allocation6 + $0x58] sm:$0xff]
    %v74 = vld [vmem:[#allocation6 + $0x60] sm:$0x7]
    %v75 = vld [vmem:[%s2] sm:$0x1]
    %v76 = vld [vmem:[#allocation4] sm:$0x3]
    %v77 = vperm.slane %v76, 0
    %v78 = vlaneseq
    %v79 = vshrl.u32 %v78, 7
    %81 = vset.pattern.permute.xlu0 %v79
    %82 = vperm.xlu0 %81, %v77
    %v83 = vpop.permute.xlu0 %82
    %v84 = vlaneseq
    %v85 = vshrl.u32 %v84, 7
    %v86 = vadd.s32 %v85, 8
    %87 = vset.pattern.permute.xlu0 %v86
    %88 = vperm.xlu0 %87, %v77
    %v89 = vpop.permute.xlu0 %88
    %v90 = vperm.slane %v76, 1
    %v91 = vlaneseq
    %v92 = vshrl.u32 %v91, 7
    %94 = vset.pattern.permute.xlu0 %v92
    %95 = vperm.xlu0 %94, %v90
    %v96 = vpop.permute.xlu0 %95
    %v97 = vlaneseq
    %v98 = vshrl.u32 %v97, 7
    %v99 = vadd.s32 %v98, 8
    %100 = vset.pattern.permute.xlu0 %v99
    %101 = vperm.xlu0 %100, %v90
    %v102 = vpop.permute.xlu0 %101
    %vm103 = vcmask 7168
    %v104 = vsel %vm103, %v83, 0.0
    %v105 = vsel %vm103, %v89, 0.0
    %v106 = vsel %vm103, %v96, 0.0
    %v107 = vsel %vm103, %v102, 0.0
    %108 = vst.msk [vmem:[#allocation2 + $0x1] sm:$0xff] %vm54, %v104
    %109 = vst.msk [vmem:[#allocation2 + $0x9] sm:$0xff] %vm54, %v105
    %110 = vst.msk [vmem:[#allocation2 + $0x19] sm:$0xff] %vm54, %v106
    %111 = vst.msk [vmem:[#allocation2 + $0x21] sm:$0xff] %vm54, %v107
    %v112 = vld [vmem:[#allocation2] sm:$0xff]
    %v113 = vld [vmem:[#allocation2 + $0x8] sm:$0xff]
    %v114 = vld [vmem:[#allocation2 + $0x18] sm:$0xff]
    %v115 = vld [vmem:[#allocation2 + $0x20] sm:$0xff]
    %v116 = vld [vmem:[#allocation2 + $0x2] sm:$0xff]
    %v117 = vld [vmem:[#allocation2 + $0xa] sm:$0xff]
    %v118 = vld [vmem:[#allocation2 + $0x1a] sm:$0xff]
    %v119 = vld [vmem:[#allocation2 + $0x22] sm:$0xff]
    %124 = vrot.lane.b32.xlu0 %v104, 33
    %v125 = vpop.permute.xlu0 %124
    %126 = vrot.lane.b32.xlu0 %v105, 33
    %v127 = vpop.permute.xlu0 %126
    %128 = vrot.lane.b32.xlu0 %v106, 33
    %v129 = vpop.permute.xlu0 %128
    %130 = vrot.lane.b32.xlu0 %v107, 33
    %v131 = vpop.permute.xlu0 %130
    %140 = vrot.lane.b32.xlu0 %v116, 66
    %v141 = vpop.permute.xlu0 %140
    %142 = vrot.lane.b32.xlu0 %v117, 66
    %v143 = vpop.permute.xlu0 %142
    %144 = vrot.lane.b32.xlu0 %v118, 66
    %v145 = vpop.permute.xlu0 %144
    %146 = vrot.lane.b32.xlu0 %v119, 66
    %v147 = vpop.permute.xlu0 %146
    %v152 = vsel %vm54, %v112, %v125
    %v153 = vsel %vm54, %v113, %v127
    %v154 = vsel %vm54, %v114, %v129
    %v155 = vsel %vm54, %v115, %v131
    %vm156 = vcmask 539648
    %v157 = vsel %vm156, %v152, %v141
    %v158 = vsel %vm156, %v153, %v143
    %v159 = vsel %vm156, %v154, %v145
    %v160 = vsel %vm156, %v155, %v147
    %v162 = vperm.slane %v75, 0
    %vm164 = vcmask 809984
    %v166 = vsel %vm164, %v157, 0
    %v169 = vsel %vm164, %v158, 0
    %v172 = vsel %vm164, %v159, 0
    %v175 = vsel %vm164, %v160, 0
    %vm177 = vcmask 1042432
    %v179 = vsel %vm177, %v74, 0
    %181 = vmatpush.msra.mxu0 0.0
    %182 = vmatpush.msra.mxu0 0.0
    %183 = vmatpush.msra.mxu0 0.0
    %184 = vmatpush.msra.mxu0 %v179
    %185 = vmatpush.msra.mxu0 %v73
    %186 = vmatpush.msra.mxu0 %v72
    %187 = vmatpush.msra.mxu0 %v71
    %188 = vmatpush.msra.mxu0 %v70
    %189 = vmatpush.msra.mxu0 %v69
    %190 = vmatpush.msra.mxu0 %v68
    %191 = vmatpush.msra.mxu0 %v67
    %192 = vmatpush.msra.mxu0 %v66
    %193 = vmatpush.msra.mxu0 %v65
    %194 = vmatpush.msra.mxu0 %v64
    %195 = vmatpush.msra.mxu0 %v63
    %196 = vmatpush.msra.mxu0 %v62
    %197 = vmatmul.f32.gmra.mxu0 %v166
    %v198 = vpop.f32.mrf.mxu0
    %v199 = vadd.f32 %v162, %v198
    %200 = vmatmul.f32.gmra.mxu0 %v169
    %v201 = vpop.f32.mrf.mxu0
    %v202 = vadd.f32 %v162, %v201
    %203 = vmatmul.f32.gmra.mxu0 %v172
    %v204 = vpop.f32.mrf.mxu0
    %v205 = vadd.f32 %v162, %v204
    %206 = vmatmul.f32.gmra.mxu0 %v175
    %v207 = vpop.f32.mrf.mxu0
    %v208 = vadd.f32 %v162, %v207
    %209 = vdwg.mxu0
    %v210 = vlaneseq
    %v211 = vand.u32 %v210, 127
    %vm212 = vcmp.ge.s32.totalorder %v211, 96
    %v213 = vtanh.pop %v199
    %v214 = vtanh.pop %v202
    %v215 = vtanh.pop %v205
    %v216 = vtanh.pop %v208
    %v217 = vxor.u32 %v199, 2147483648
    %v218 = vxor.u32 %v202, 2147483648
    %v219 = vxor.u32 %v205, 2147483648
    %v220 = vxor.u32 %v208, 2147483648
    %v221 = vmul.f32 %v217, 1.442695
    %v222 = vpow.pop %v221
    %v223 = vmul.f32 %v218, 1.442695
    %v224 = vpow.pop %v223
    %v225 = vmul.f32 %v219, 1.442695
    %v226 = vpow.pop %v225
    %v227 = vmul.f32 %v220, 1.442695
    %v228 = vpow.pop %v227
    %v229 = vadd.f32 %v222, 1.0
    %v230 = vadd.f32 %v224, 1.0
    %v231 = vadd.f32 %v226, 1.0
    %v232 = vadd.f32 %v228, 1.0
    %v233 = vrcp.pop %v229
    %v234 = vmul.f32 %v229, %v233
    %v235 = vsub.f32 1.0, %v234
    %v236 = vmul.f32 %v233, %v235
    %v237 = vadd.f32 %v233, %v236
    %vm238 = vweird.f32 %v229
    %vm239 = vweird.f32 %v233
    %vm240 = vmor %vm238, %vm239
    %v241 = vsel %vm240, %v233, %v237
    %v242 = vand.u32 2147483647, %v229
    %vm243 = vcmp.eq.f32.partialorder %v242, 8.507059e+37
    %v244 = vand.u32 %v229, 2147483648
    %v245 = vor.u32 1.1754944e-38, %v244
    %v246 = vsel %vm243, %v245, %v241
    %v247 = vmul.f32 1.0, %v246
    %v248 = vrcp.pop %v230
    %v249 = vmul.f32 %v230, %v248
    %v250 = vsub.f32 1.0, %v249
    %v251 = vmul.f32 %v248, %v250
    %v252 = vadd.f32 %v248, %v251
    %vm253 = vweird.f32 %v230
    %vm254 = vweird.f32 %v248
    %vm255 = vmor %vm253, %vm254
    %v256 = vsel %vm255, %v248, %v252
    %v257 = vand.u32 2147483647, %v230
    %vm258 = vcmp.eq.f32.partialorder %v257, 8.507059e+37
    %v259 = vand.u32 %v230, 2147483648
    %v260 = vor.u32 1.1754944e-38, %v259
    %v261 = vsel %vm258, %v260, %v256
    %v262 = vmul.f32 1.0, %v261
    %v263 = vrcp.pop %v231
    %v264 = vmul.f32 %v231, %v263
    %v265 = vsub.f32 1.0, %v264
    %v266 = vmul.f32 %v263, %v265
    %v267 = vadd.f32 %v263, %v266
    %vm268 = vweird.f32 %v231
    %vm269 = vweird.f32 %v263
    %vm270 = vmor %vm268, %vm269
    %v271 = vsel %vm270, %v263, %v267
    %v272 = vand.u32 2147483647, %v231
    %vm273 = vcmp.eq.f32.partialorder %v272, 8.507059e+37
    %v274 = vand.u32 %v231, 2147483648
    %v275 = vor.u32 1.1754944e-38, %v274
    %v276 = vsel %vm273, %v275, %v271
    %v277 = vmul.f32 1.0, %v276
    %v278 = vrcp.pop %v232
    %v279 = vmul.f32 %v232, %v278
    %v280 = vsub.f32 1.0, %v279
    %v281 = vmul.f32 %v278, %v280
    %v282 = vadd.f32 %v278, %v281
    %vm283 = vweird.f32 %v232
    %vm284 = vweird.f32 %v278
    %vm285 = vmor %vm283, %vm284
    %v286 = vsel %vm285, %v278, %v282
    %v287 = vand.u32 2147483647, %v232
    %vm288 = vcmp.eq.f32.partialorder %v287, 8.507059e+37
    %v289 = vand.u32 %v232, 2147483648
    %v290 = vor.u32 1.1754944e-38, %v289
    %v291 = vsel %vm288, %v290, %v286
    %v292 = vmul.f32 1.0, %v291
    %v293 = vsel %vm212, %v213, %v247
    %v294 = vsel %vm212, %v214, %v262
    %v295 = vsel %vm212, %v215, %v277
    %v296 = vsel %vm212, %v216, %v292
    %v297 = vmul.f32 %v293, 0.0
    %v298 = vmul.f32 %v294, 0.0
    %v299 = vmul.f32 %v295, 0.0
    %v300 = vmul.f32 %v296, 0.0
    %305 = vrot.lane.b32.xlu0 %v293, 32
    %v306 = vpop.permute.xlu0 %305
    %307 = vrot.lane.b32.xlu0 %v294, 32
    %v308 = vpop.permute.xlu0 %307
    %309 = vrot.lane.b32.xlu0 %v295, 32
    %v310 = vpop.permute.xlu0 %309
    %311 = vrot.lane.b32.xlu0 %v296, 32
    %v312 = vpop.permute.xlu0 %311
    %v317 = vmul.f32 %v293, %v306
    %v318 = vmul.f32 %v294, %v308
    %v319 = vmul.f32 %v295, %v310
    %v320 = vmul.f32 %v296, %v312
    %325 = vrot.lane.b32.xlu0 %v317, 32
    %v326 = vpop.permute.xlu0 %325
    %327 = vrot.lane.b32.xlu0 %v318, 32
    %v328 = vpop.permute.xlu0 %327
    %329 = vrot.lane.b32.xlu0 %v319, 32
    %v330 = vpop.permute.xlu0 %329
    %331 = vrot.lane.b32.xlu0 %v320, 32
    %v332 = vpop.permute.xlu0 %331
    %v337 = vadd.f32 %v297, %v326
    %v338 = vadd.f32 %v298, %v328
    %v339 = vadd.f32 %v299, %v330
    %v340 = vadd.f32 %v300, %v332
    %v341 = vtanh.pop %v337
    %v342 = vtanh.pop %v338
    %v343 = vtanh.pop %v339
    %v344 = vtanh.pop %v340
    %349 = vrot.lane.b32.xlu0 %v341, 32
    %v350 = vpop.permute.xlu0 %349
    %351 = vrot.lane.b32.xlu0 %v342, 32
    %v352 = vpop.permute.xlu0 %351
    %353 = vrot.lane.b32.xlu0 %v343, 32
    %v354 = vpop.permute.xlu0 %353
    %355 = vrot.lane.b32.xlu0 %v344, 32
    %v356 = vpop.permute.xlu0 %355
    %v361 = vmul.f32 %v293, %v350
    %v362 = vmul.f32 %v294, %v352
    %v363 = vmul.f32 %v295, %v354
    %v364 = vmul.f32 %v296, %v356
    %s365 = scalar_lea.vmem [#allocation4], 2
    %v366 = vld [vmem:[%s365] sm:$0x3]
    %v367 = vperm.slane %v366, 0
    %v368 = vlaneseq
    %v369 = vshrl.u32 %v368, 7
    %371 = vset.pattern.permute.xlu0 %v369
    %372 = vperm.xlu0 %371, %v367
    %v373 = vpop.permute.xlu0 %372
    %v374 = vlaneseq
    %v375 = vshrl.u32 %v374, 7
    %v376 = vadd.s32 %v375, 8
    %377 = vset.pattern.permute.xlu0 %v376
    %378 = vperm.xlu0 %377, %v367
    %v379 = vpop.permute.xlu0 %378
    %v380 = vperm.slane %v366, 1
    %v381 = vlaneseq
    %v382 = vshrl.u32 %v381, 7
    %384 = vset.pattern.permute.xlu0 %v382
    %385 = vperm.xlu0 %384, %v380
    %v386 = vpop.permute.xlu0 %385
    %v387 = vlaneseq
    %v388 = vshrl.u32 %v387, 7
    %v389 = vadd.s32 %v388, 8
    %390 = vset.pattern.permute.xlu0 %v389
    %391 = vperm.xlu0 %390, %v380
    %v392 = vpop.permute.xlu0 %391
    %397 = vrot.lane.b32.xlu0 %v361, 65
    %v398 = vpop.permute.xlu0 %397
    %399 = vrot.lane.b32.xlu0 %v362, 65
    %v400 = vpop.permute.xlu0 %399
    %401 = vrot.lane.b32.xlu0 %v363, 65
    %v402 = vpop.permute.xlu0 %401
    %403 = vrot.lane.b32.xlu0 %v364, 65
    %v404 = vpop.permute.xlu0 %403
    %v409 = vsel %vm103, %v373, %v398
    %v410 = vsel %vm103, %v379, %v400
    %v411 = vsel %vm103, %v386, %v402
    %v412 = vsel %vm103, %v392, %v404
    %413 = vst.msk [vmem:[#allocation2 + $0x1] sm:$0xff] %vm54, %v409
    %414 = vst.msk [vmem:[#allocation2 + $0x9] sm:$0xff] %vm54, %v410
    %415 = vst.msk [vmem:[#allocation2 + $0x19] sm:$0xff] %vm54, %v411
    %416 = vst.msk [vmem:[#allocation2 + $0x21] sm:$0xff] %vm54, %v412
    %v417 = vld [vmem:[#allocation2] sm:$0xff]
    %v418 = vld [vmem:[#allocation2 + $0x8] sm:$0xff]
    %v419 = vld [vmem:[#allocation2 + $0x18] sm:$0xff]
    %v420 = vld [vmem:[#allocation2 + $0x20] sm:$0xff]
    %v421 = vld [vmem:[#allocation2 + $0x2] sm:$0xff]
    %v422 = vld [vmem:[#allocation2 + $0xa] sm:$0xff]
    %v423 = vld [vmem:[#allocation2 + $0x1a] sm:$0xff]
    %v424 = vld [vmem:[#allocation2 + $0x22] sm:$0xff]
    %429 = vrot.lane.b32.xlu0 %v409, 33
    %v430 = vpop.permute.xlu0 %429
    %431 = vrot.lane.b32.xlu0 %v410, 33
    %v432 = vpop.permute.xlu0 %431
    %433 = vrot.lane.b32.xlu0 %v411, 33
    %v434 = vpop.permute.xlu0 %433
    %435 = vrot.lane.b32.xlu0 %v412, 33
    %v436 = vpop.permute.xlu0 %435
    %445 = vrot.lane.b32.xlu0 %v421, 66
    %v446 = vpop.permute.xlu0 %445
    %447 = vrot.lane.b32.xlu0 %v422, 66
    %v448 = vpop.permute.xlu0 %447
    %449 = vrot.lane.b32.xlu0 %v423, 66
    %v450 = vpop.permute.xlu0 %449
    %451 = vrot.lane.b32.xlu0 %v424, 66
    %v452 = vpop.permute.xlu0 %451
    %v457 = vsel %vm54, %v417, %v430
    %v458 = vsel %vm54, %v418, %v432
    %v459 = vsel %vm54, %v419, %v434
    %v460 = vsel %vm54, %v420, %v436
    %v461 = vsel %vm156, %v457, %v446
    %v462 = vsel %vm156, %v458, %v448
    %v463 = vsel %vm156, %v459, %v450
    %v464 = vsel %vm156, %v460, %v452
    %v466 = vsel %vm164, %v461, 0
    %v469 = vsel %vm164, %v462, 0
    %v472 = vsel %vm164, %v463, 0
    %v475 = vsel %vm164, %v464, 0
    %477 = vmatpush.msra.mxu0 0.0
    %478 = vmatpush.msra.mxu0 0.0
    %479 = vmatpush.msra.mxu0 0.0
    %480 = vmatpush.msra.mxu0 %v179
    %481 = vmatpush.msra.mxu0 %v73
    %482 = vmatpush.msra.mxu0 %v72
    %483 = vmatpush.msra.mxu0 %v71
    %484 = vmatpush.msra.mxu0 %v70
    %485 = vmatpush.msra.mxu0 %v69
    %486 = vmatpush.msra.mxu0 %v68
    %487 = vmatpush.msra.mxu0 %v67
    %488 = vmatpush.msra.mxu0 %v66
    %489 = vmatpush.msra.mxu0 %v65
    %490 = vmatpush.msra.mxu0 %v64
    %491 = vmatpush.msra.mxu0 %v63
    %492 = vmatpush.msra.mxu0 %v62
    %493 = vmatmul.f32.gmra.mxu0 %v466
    %v494 = vpop.f32.mrf.mxu0
    %v495 = vadd.f32 %v162, %v494
    %496 = vmatmul.f32.gmra.mxu0 %v469
    %v497 = vpop.f32.mrf.mxu0
    %v498 = vadd.f32 %v162, %v497
    %499 = vmatmul.f32.gmra.mxu0 %v472
    %v500 = vpop.f32.mrf.mxu0
    %v501 = vadd.f32 %v162, %v500
    %502 = vmatmul.f32.gmra.mxu0 %v475
    %v503 = vpop.f32.mrf.mxu0
    %v504 = vadd.f32 %v162, %v503
    %505 = vdwg.mxu0
    %v506 = vtanh.pop %v495
    %v507 = vtanh.pop %v498
    %v508 = vtanh.pop %v501
    %v509 = vtanh.pop %v504
    %v510 = vxor.u32 %v495, 2147483648
    %v511 = vxor.u32 %v498, 2147483648
    %v512 = vxor.u32 %v501, 2147483648
    %v513 = vxor.u32 %v504, 2147483648
    %v514 = vmul.f32 %v510, 1.442695
    %v515 = vpow.pop %v514
    %v516 = vmul.f32 %v511, 1.442695
    %v517 = vpow.pop %v516
    %v518 = vmul.f32 %v512, 1.442695
    %v519 = vpow.pop %v518
    %v520 = vmul.f32 %v513, 1.442695
    %v521 = vpow.pop %v520
    %v522 = vadd.f32 %v515, 1.0
    %v523 = vadd.f32 %v517, 1.0
    %v524 = vadd.f32 %v519, 1.0
    %v525 = vadd.f32 %v521, 1.0
    %v526 = vrcp.pop %v522
    %v527 = vmul.f32 %v522, %v526
    %v528 = vsub.f32 1.0, %v527
    %v529 = vmul.f32 %v526, %v528
    %v530 = vadd.f32 %v526, %v529
    %vm531 = vweird.f32 %v522
    %vm532 = vweird.f32 %v526
    %vm533 = vmor %vm531, %vm532
    %v534 = vsel %vm533, %v526, %v530
    %v535 = vand.u32 2147483647, %v522
    %vm536 = vcmp.eq.f32.partialorder %v535, 8.507059e+37
    %v537 = vand.u32 %v522, 2147483648
    %v538 = vor.u32 1.1754944e-38, %v537
    %v539 = vsel %vm536, %v538, %v534
    %v540 = vmul.f32 1.0, %v539
    %v541 = vrcp.pop %v523
    %v542 = vmul.f32 %v523, %v541
    %v543 = vsub.f32 1.0, %v542
    %v544 = vmul.f32 %v541, %v543
    %v545 = vadd.f32 %v541, %v544
    %vm546 = vweird.f32 %v523
    %vm547 = vweird.f32 %v541
    %vm548 = vmor %vm546, %vm547
    %v549 = vsel %vm548, %v541, %v545
    %v550 = vand.u32 2147483647, %v523
    %vm551 = vcmp.eq.f32.partialorder %v550, 8.507059e+37
    %v552 = vand.u32 %v523, 2147483648
    %v553 = vor.u32 1.1754944e-38, %v552
    %v554 = vsel %vm551, %v553, %v549
    %v555 = vmul.f32 1.0, %v554
    %v556 = vrcp.pop %v524
    %v557 = vmul.f32 %v524, %v556
    %v558 = vsub.f32 1.0, %v557
    %v559 = vmul.f32 %v556, %v558
    %v560 = vadd.f32 %v556, %v559
    %vm561 = vweird.f32 %v524
    %vm562 = vweird.f32 %v556
    %vm563 = vmor %vm561, %vm562
    %v564 = vsel %vm563, %v556, %v560
    %v565 = vand.u32 2147483647, %v524
    %vm566 = vcmp.eq.f32.partialorder %v565, 8.507059e+37
    %v567 = vand.u32 %v524, 2147483648
    %v568 = vor.u32 1.1754944e-38, %v567
    %v569 = vsel %vm566, %v568, %v564
    %v570 = vmul.f32 1.0, %v569
    %v571 = vrcp.pop %v525
    %v572 = vmul.f32 %v525, %v571
    %v573 = vsub.f32 1.0, %v572
    %v574 = vmul.f32 %v571, %v573
    %v575 = vadd.f32 %v571, %v574
    %vm576 = vweird.f32 %v525
    %vm577 = vweird.f32 %v571
    %vm578 = vmor %vm576, %vm577
    %v579 = vsel %vm578, %v571, %v575
    %v580 = vand.u32 2147483647, %v525
    %vm581 = vcmp.eq.f32.partialorder %v580, 8.507059e+37
    %v582 = vand.u32 %v525, 2147483648
    %v583 = vor.u32 1.1754944e-38, %v582
    %v584 = vsel %vm581, %v583, %v579
    %v585 = vmul.f32 1.0, %v584
    %v586 = vsel %vm212, %v506, %v540
    %v587 = vsel %vm212, %v507, %v555
    %v588 = vsel %vm212, %v508, %v570
    %v589 = vsel %vm212, %v509, %v585
    %v590 = vmul.f32 %v586, %v337
    %v591 = vmul.f32 %v587, %v338
    %v592 = vmul.f32 %v588, %v339
    %v593 = vmul.f32 %v589, %v340
    %598 = vrot.lane.b32.xlu0 %v586, 32
    %v599 = vpop.permute.xlu0 %598
    %600 = vrot.lane.b32.xlu0 %v587, 32
    %v601 = vpop.permute.xlu0 %600
    %602 = vrot.lane.b32.xlu0 %v588, 32
    %v603 = vpop.permute.xlu0 %602
    %604 = vrot.lane.b32.xlu0 %v589, 32
    %v605 = vpop.permute.xlu0 %604
    %v610 = vmul.f32 %v586, %v599
    %v611 = vmul.f32 %v587, %v601
    %v612 = vmul.f32 %v588, %v603
    %v613 = vmul.f32 %v589, %v605
    %618 = vrot.lane.b32.xlu0 %v610, 32
    %v619 = vpop.permute.xlu0 %618
    %620 = vrot.lane.b32.xlu0 %v611, 32
    %v621 = vpop.permute.xlu0 %620
    %622 = vrot.lane.b32.xlu0 %v612, 32
    %v623 = vpop.permute.xlu0 %622
    %624 = vrot.lane.b32.xlu0 %v613, 32
    %v625 = vpop.permute.xlu0 %624
    %v630 = vadd.f32 %v590, %v619
    %v631 = vadd.f32 %v591, %v621
    %v632 = vadd.f32 %v592, %v623
    %v633 = vadd.f32 %v593, %v625
    %v634 = vtanh.pop %v630
    %v635 = vtanh.pop %v631
    %v636 = vtanh.pop %v632
    %v637 = vtanh.pop %v633
    %642 = vrot.lane.b32.xlu0 %v634, 32
    %v643 = vpop.permute.xlu0 %642
    %644 = vrot.lane.b32.xlu0 %v635, 32
    %v645 = vpop.permute.xlu0 %644
    %646 = vrot.lane.b32.xlu0 %v636, 32
    %v647 = vpop.permute.xlu0 %646
    %648 = vrot.lane.b32.xlu0 %v637, 32
    %v649 = vpop.permute.xlu0 %648
    %v654 = vmul.f32 %v586, %v643
    %v655 = vmul.f32 %v587, %v645
    %v656 = vmul.f32 %v588, %v647
    %v657 = vmul.f32 %v589, %v649
    %s658 = scalar_lea.vmem [#allocation4], 4
    %v659 = vld [vmem:[%s658] sm:$0x3]
    %v660 = vperm.slane %v659, 0
    %v661 = vlaneseq
    %v662 = vshrl.u32 %v661, 7
    %664 = vset.pattern.permute.xlu0 %v662
    %665 = vperm.xlu0 %664, %v660
    %v666 = vpop.permute.xlu0 %665
    %v667 = vlaneseq
    %v668 = vshrl.u32 %v667, 7
    %v669 = vadd.s32 %v668, 8
    %670 = vset.pattern.permute.xlu0 %v669
    %671 = vperm.xlu0 %670, %v660
    %v672 = vpop.permute.xlu0 %671
    %v673 = vperm.slane %v659, 1
    %v674 = vlaneseq
    %v675 = vshrl.u32 %v674, 7
    %677 = vset.pattern.permute.xlu0 %v675
    %678 = vperm.xlu0 %677, %v673
    %v679 = vpop.permute.xlu0 %678
    %v680 = vlaneseq
    %v681 = vshrl.u32 %v680, 7
    %v682 = vadd.s32 %v681, 8
    %683 = vset.pattern.permute.xlu0 %v682
    %684 = vperm.xlu0 %683, %v673
    %v685 = vpop.permute.xlu0 %684
    %690 = vrot.lane.b32.xlu0 %v654, 65
    %v691 = vpop.permute.xlu0 %690
    %692 = vrot.lane.b32.xlu0 %v655, 65
    %v693 = vpop.permute.xlu0 %692
    %694 = vrot.lane.b32.xlu0 %v656, 65
    %v695 = vpop.permute.xlu0 %694
    %696 = vrot.lane.b32.xlu0 %v657, 65
    %v697 = vpop.permute.xlu0 %696
    %v702 = vsel %vm103, %v666, %v691
    %v703 = vsel %vm103, %v672, %v693
    %v704 = vsel %vm103, %v679, %v695
    %v705 = vsel %vm103, %v685, %v697
    %706 = vst.msk [vmem:[#allocation2 + $0x1] sm:$0xff] %vm54, %v702
    %707 = vst.msk [vmem:[#allocation2 + $0x9] sm:$0xff] %vm54, %v703
    %708 = vst.msk [vmem:[#allocation2 + $0x19] sm:$0xff] %vm54, %v704
    %709 = vst.msk [vmem:[#allocation2 + $0x21] sm:$0xff] %vm54, %v705
    %v710 = vld [vmem:[#allocation2] sm:$0xff]
    %v711 = vld [vmem:[#allocation2 + $0x8] sm:$0xff]
    %v712 = vld [vmem:[#allocation2 + $0x18] sm:$0xff]
    %v713 = vld [vmem:[#allocation2 + $0x20] sm:$0xff]
    %v714 = vld [vmem:[#allocation2 + $0x2] sm:$0xff]
    %v715 = vld [vmem:[#allocation2 + $0xa] sm:$0xff]
    %v716 = vld [vmem:[#allocation2 + $0x1a] sm:$0xff]
    %v717 = vld [vmem:[#allocation2 + $0x22] sm:$0xff]
    %722 = vrot.lane.b32.xlu0 %v702, 33
    %v723 = vpop.permute.xlu0 %722
    %724 = vrot.lane.b32.xlu0 %v703, 33
    %v725 = vpop.permute.xlu0 %724
    %726 = vrot.lane.b32.xlu0 %v704, 33
    %v727 = vpop.permute.xlu0 %726
    %728 = vrot.lane.b32.xlu0 %v705, 33
    %v729 = vpop.permute.xlu0 %728
    %738 = vrot.lane.b32.xlu0 %v714, 66
    %v739 = vpop.permute.xlu0 %738
    %740 = vrot.lane.b32.xlu0 %v715, 66
    %v741 = vpop.permute.xlu0 %740
    %742 = vrot.lane.b32.xlu0 %v716, 66
    %v743 = vpop.permute.xlu0 %742
    %744 = vrot.lane.b32.xlu0 %v717, 66
    %v745 = vpop.permute.xlu0 %744
    %v750 = vsel %vm54, %v710, %v723
    %v751 = vsel %vm54, %v711, %v725
    %v752 = vsel %vm54, %v712, %v727
    %v753 = vsel %vm54, %v713, %v729
    %v754 = vsel %vm156, %v750, %v739
    %v755 = vsel %vm156, %v751, %v741
    %v756 = vsel %vm156, %v752, %v743
    %v757 = vsel %vm156, %v753, %v745
    %v759 = vsel %vm164, %v754, 0
    %v762 = vsel %vm164, %v755, 0
    %v765 = vsel %vm164, %v756, 0
    %v768 = vsel %vm164, %v757, 0
    %770 = vmatpush.msra.mxu0 0.0
    %771 = vmatpush.msra.mxu0 0.0
    %772 = vmatpush.msra.mxu0 0.0
    %773 = vmatpush.msra.mxu0 %v179
    %774 = vmatpush.msra.mxu0 %v73
    %775 = vmatpush.msra.mxu0 %v72
    %776 = vmatpush.msra.mxu0 %v71
    %777 = vmatpush.msra.mxu0 %v70
    %778 = vmatpush.msra.mxu0 %v69
    %779 = vmatpush.msra.mxu0 %v68
    %780 = vmatpush.msra.mxu0 %v67
    %781 = vmatpush.msra.mxu0 %v66
    %782 = vmatpush.msra.mxu0 %v65
    %783 = vmatpush.msra.mxu0 %v64
    %784 = vmatpush.msra.mxu0 %v63
    %785 = vmatpush.msra.mxu0 %v62
    %786 = vmatmul.f32.gmra.mxu0 %v759
    %v787 = vpop.f32.mrf.mxu0
    %v788 = vadd.f32 %v162, %v787
    %789 = vmatmul.f32.gmra.mxu0 %v762
    %v790 = vpop.f32.mrf.mxu0
    %v791 = vadd.f32 %v162, %v790
    %792 = vmatmul.f32.gmra.mxu0 %v765
    %v793 = vpop.f32.mrf.mxu0
    %v794 = vadd.f32 %v162, %v793
    %795 = vmatmul.f32.gmra.mxu0 %v768
    %v796 = vpop.f32.mrf.mxu0
    %v797 = vadd.f32 %v162, %v796
    %798 = vdwg.mxu0
    %v799 = vtanh.pop %v788
    %v800 = vtanh.pop %v791
    %v801 = vtanh.pop %v794
    %v802 = vtanh.pop %v797
    %v803 = vxor.u32 %v788, 2147483648
    %v804 = vxor.u32 %v791, 2147483648
    %v805 = vxor.u32 %v794, 2147483648
    %v806 = vxor.u32 %v797, 2147483648
    %v807 = vmul.f32 %v803, 1.442695
    %v808 = vpow.pop %v807
    %v809 = vmul.f32 %v804, 1.442695
    %v810 = vpow.pop %v809
    %v811 = vmul.f32 %v805, 1.442695
    %v812 = vpow.pop %v811
    %v813 = vmul.f32 %v806, 1.442695
    %v814 = vpow.pop %v813
    %v815 = vadd.f32 %v808, 1.0
    %v816 = vadd.f32 %v810, 1.0
    %v817 = vadd.f32 %v812, 1.0
    %v818 = vadd.f32 %v814, 1.0
    %v819 = vrcp.pop %v815
    %v820 = vmul.f32 %v815, %v819
    %v821 = vsub.f32 1.0, %v820
    %v822 = vmul.f32 %v819, %v821
    %v823 = vadd.f32 %v819, %v822
    %vm824 = vweird.f32 %v815
    %vm825 = vweird.f32 %v819
    %vm826 = vmor %vm824, %vm825
    %v827 = vsel %vm826, %v819, %v823
    %v828 = vand.u32 2147483647, %v815
    %vm829 = vcmp.eq.f32.partialorder %v828, 8.507059e+37
    %v830 = vand.u32 %v815, 2147483648
    %v831 = vor.u32 1.1754944e-38, %v830
    %v832 = vsel %vm829, %v831, %v827
    %v833 = vmul.f32 1.0, %v832
    %v834 = vrcp.pop %v816
    %v835 = vmul.f32 %v816, %v834
    %v836 = vsub.f32 1.0, %v835
    %v837 = vmul.f32 %v834, %v836
    %v838 = vadd.f32 %v834, %v837
    %vm839 = vweird.f32 %v816
    %vm840 = vweird.f32 %v834
    %vm841 = vmor %vm839, %vm840
    %v842 = vsel %vm841, %v834, %v838
    %v843 = vand.u32 2147483647, %v816
    %vm844 = vcmp.eq.f32.partialorder %v843, 8.507059e+37
    %v845 = vand.u32 %v816, 2147483648
    %v846 = vor.u32 1.1754944e-38, %v845
    %v847 = vsel %vm844, %v846, %v842
    %v848 = vmul.f32 1.0, %v847
    %v849 = vrcp.pop %v817
    %v850 = vmul.f32 %v817, %v849
    %v851 = vsub.f32 1.0, %v850
    %v852 = vmul.f32 %v849, %v851
    %v853 = vadd.f32 %v849, %v852
    %vm854 = vweird.f32 %v817
    %vm855 = vweird.f32 %v849
    %vm856 = vmor %vm854, %vm855
    %v857 = vsel %vm856, %v849, %v853
    %v858 = vand.u32 2147483647, %v817
    %vm859 = vcmp.eq.f32.partialorder %v858, 8.507059e+37
    %v860 = vand.u32 %v817, 2147483648
    %v861 = vor.u32 1.1754944e-38, %v860
    %v862 = vsel %vm859, %v861, %v857
    %v863 = vmul.f32 1.0, %v862
    %v864 = vrcp.pop %v818
    %v865 = vmul.f32 %v818, %v864
    %v866 = vsub.f32 1.0, %v865
    %v867 = vmul.f32 %v864, %v866
    %v868 = vadd.f32 %v864, %v867
    %vm869 = vweird.f32 %v818
    %vm870 = vweird.f32 %v864
    %vm871 = vmor %vm869, %vm870
    %v872 = vsel %vm871, %v864, %v868
    %v873 = vand.u32 2147483647, %v818
    %vm874 = vcmp.eq.f32.partialorder %v873, 8.507059e+37
    %v875 = vand.u32 %v818, 2147483648
    %v876 = vor.u32 1.1754944e-38, %v875
    %v877 = vsel %vm874, %v876, %v872
    %v878 = vmul.f32 1.0, %v877
    %v879 = vsel %vm212, %v799, %v833
    %v880 = vsel %vm212, %v800, %v848
    %v881 = vsel %vm212, %v801, %v863
    %v882 = vsel %vm212, %v802, %v878
    %v883 = vmul.f32 %v879, %v630
    %v884 = vmul.f32 %v880, %v631
    %v885 = vmul.f32 %v881, %v632
    %v886 = vmul.f32 %v882, %v633
    %891 = vrot.lane.b32.xlu0 %v879, 32
    %v892 = vpop.permute.xlu0 %891
    %893 = vrot.lane.b32.xlu0 %v880, 32
    %v894 = vpop.permute.xlu0 %893
    %895 = vrot.lane.b32.xlu0 %v881, 32
    %v896 = vpop.permute.xlu0 %895
    %897 = vrot.lane.b32.xlu0 %v882, 32
    %v898 = vpop.permute.xlu0 %897
    %v903 = vmul.f32 %v879, %v892
    %v904 = vmul.f32 %v880, %v894
    %v905 = vmul.f32 %v881, %v896
    %v906 = vmul.f32 %v882, %v898
    %911 = vrot.lane.b32.xlu0 %v903, 32
    %v912 = vpop.permute.xlu0 %911
    %913 = vrot.lane.b32.xlu0 %v904, 32
    %v914 = vpop.permute.xlu0 %913
    %915 = vrot.lane.b32.xlu0 %v905, 32
    %v916 = vpop.permute.xlu0 %915
    %917 = vrot.lane.b32.xlu0 %v906, 32
    %v918 = vpop.permute.xlu0 %917
    %v923 = vadd.f32 %v883, %v912
    %v924 = vadd.f32 %v884, %v914
    %v925 = vadd.f32 %v885, %v916
    %v926 = vadd.f32 %v886, %v918
    %v927 = vtanh.pop %v923
    %v928 = vtanh.pop %v924
    %v929 = vtanh.pop %v925
    %v930 = vtanh.pop %v926
    %935 = vrot.lane.b32.xlu0 %v927, 32
    %v936 = vpop.permute.xlu0 %935
    %937 = vrot.lane.b32.xlu0 %v928, 32
    %v938 = vpop.permute.xlu0 %937
    %939 = vrot.lane.b32.xlu0 %v929, 32
    %v940 = vpop.permute.xlu0 %939
    %941 = vrot.lane.b32.xlu0 %v930, 32
    %v942 = vpop.permute.xlu0 %941
    %v947 = vmul.f32 %v879, %v936
    %v948 = vmul.f32 %v880, %v938
    %v949 = vmul.f32 %v881, %v940
    %v950 = vmul.f32 %v882, %v942
    %s951 = scalar_lea.vmem [#allocation4], 6
    %v952 = vld [vmem:[%s951] sm:$0x3]
    %v953 = vperm.slane %v952, 0
    %v954 = vlaneseq
    %v955 = vshrl.u32 %v954, 7
    %957 = vset.pattern.permute.xlu0 %v955
    %958 = vperm.xlu0 %957, %v953
    %v959 = vpop.permute.xlu0 %958
    %v960 = vlaneseq
    %v961 = vshrl.u32 %v960, 7
    %v962 = vadd.s32 %v961, 8
    %963 = vset.pattern.permute.xlu0 %v962
    %964 = vperm.xlu0 %963, %v953
    %v965 = vpop.permute.xlu0 %964
    %v966 = vperm.slane %v952, 1
    %v967 = vlaneseq
    %v968 = vshrl.u32 %v967, 7
    %970 = vset.pattern.permute.xlu0 %v968
    %971 = vperm.xlu0 %970, %v966
    %v972 = vpop.permute.xlu0 %971
    %v973 = vlaneseq
    %v974 = vshrl.u32 %v973, 7
    %v975 = vadd.s32 %v974, 8
    %976 = vset.pattern.permute.xlu0 %v975
    %977 = vperm.xlu0 %976, %v966
    %v978 = vpop.permute.xlu0 %977
    %983 = vrot.lane.b32.xlu0 %v947, 65
    %v984 = vpop.permute.xlu0 %983
    %985 = vrot.lane.b32.xlu0 %v948, 65
    %v986 = vpop.permute.xlu0 %985
    %987 = vrot.lane.b32.xlu0 %v949, 65
    %v988 = vpop.permute.xlu0 %987
    %989 = vrot.lane.b32.xlu0 %v950, 65
    %v990 = vpop.permute.xlu0 %989
    %v995 = vsel %vm103, %v959, %v984
    %v996 = vsel %vm103, %v965, %v986
    %v997 = vsel %vm103, %v972, %v988
    %v998 = vsel %vm103, %v978, %v990
    %999 = vst.msk [vmem:[#allocation2 + $0x1] sm:$0xff] %vm54, %v995
    %1000 = vst.msk [vmem:[#allocation2 + $0x9] sm:$0xff] %vm54, %v996
    %1001 = vst.msk [vmem:[#allocation2 + $0x19] sm:$0xff] %vm54, %v997
    %1002 = vst.msk [vmem:[#allocation2 + $0x21] sm:$0xff] %vm54, %v998
    %v1003 = vld [vmem:[#allocation2] sm:$0xff]
    %v1004 = vld [vmem:[#allocation2 + $0x8] sm:$0xff]
    %v1005 = vld [vmem:[#allocation2 + $0x18] sm:$0xff]
    %v1006 = vld [vmem:[#allocation2 + $0x20] sm:$0xff]
    %v1007 = vld [vmem:[#allocation2 + $0x2] sm:$0xff]
    %v1008 = vld [vmem:[#allocation2 + $0xa] sm:$0xff]
    %v1009 = vld [vmem:[#allocation2 + $0x1a] sm:$0xff]
    %v1010 = vld [vmem:[#allocation2 + $0x22] sm:$0xff]
    %1015 = vrot.lane.b32.xlu0 %v995, 33
    %v1016 = vpop.permute.xlu0 %1015
    %1017 = vrot.lane.b32.xlu0 %v996, 33
    %v1018 = vpop.permute.xlu0 %1017
    %1019 = vrot.lane.b32.xlu0 %v997, 33
    %v1020 = vpop.permute.xlu0 %1019
    %1021 = vrot.lane.b32.xlu0 %v998, 33
    %v1022 = vpop.permute.xlu0 %1021
    %1031 = vrot.lane.b32.xlu0 %v1007, 66
    %v1032 = vpop.permute.xlu0 %1031
    %1033 = vrot.lane.b32.xlu0 %v1008, 66
    %v1034 = vpop.permute.xlu0 %1033
    %1035 = vrot.lane.b32.xlu0 %v1009, 66
    %v1036 = vpop.permute.xlu0 %1035
    %1037 = vrot.lane.b32.xlu0 %v1010, 66
    %v1038 = vpop.permute.xlu0 %1037
    %v1043 = vsel %vm54, %v1003, %v1016
    %v1044 = vsel %vm54, %v1004, %v1018
    %v1045 = vsel %vm54, %v1005, %v1020
    %v1046 = vsel %vm54, %v1006, %v1022
    %v1047 = vsel %vm156, %v1043, %v1032
    %v1048 = vsel %vm156, %v1044, %v1034
    %v1049 = vsel %vm156, %v1045, %v1036
    %v1050 = vsel %vm156, %v1046, %v1038
    %v1052 = vsel %vm164, %v1047, 0
    %v1055 = vsel %vm164, %v1048, 0
    %v1058 = vsel %vm164, %v1049, 0
    %v1061 = vsel %vm164, %v1050, 0
    %1063 = vmatpush.msra.mxu0 0.0
    %1064 = vmatpush.msra.mxu0 0.0
    %1065 = vmatpush.msra.mxu0 0.0
    %1066 = vmatpush.msra.mxu0 %v179
    %1067 = vmatpush.msra.mxu0 %v73
    %1068 = vmatpush.msra.mxu0 %v72
    %1069 = vmatpush.msra.mxu0 %v71
    %1070 = vmatpush.msra.mxu0 %v70
    %1071 = vmatpush.msra.mxu0 %v69
    %1072 = vmatpush.msra.mxu0 %v68
    %1073 = vmatpush.msra.mxu0 %v67
    %1074 = vmatpush.msra.mxu0 %v66
    %1075 = vmatpush.msra.mxu0 %v65
    %1076 = vmatpush.msra.mxu0 %v64
    %1077 = vmatpush.msra.mxu0 %v63
    %1078 = vmatpush.msra.mxu0 %v62
    %1079 = vmatmul.f32.gmra.mxu0 %v1052
    %v1080 = vpop.f32.mrf.mxu0
    %v1081 = vadd.f32 %v162, %v1080
    %1082 = vmatmul.f32.gmra.mxu0 %v1055
    %v1083 = vpop.f32.mrf.mxu0
    %v1084 = vadd.f32 %v162, %v1083
    %1085 = vmatmul.f32.gmra.mxu0 %v1058
    %v1086 = vpop.f32.mrf.mxu0
    %v1087 = vadd.f32 %v162, %v1086
    %1088 = vmatmul.f32.gmra.mxu0 %v1061
    %v1089 = vpop.f32.mrf.mxu0
    %v1090 = vadd.f32 %v162, %v1089
    %1091 = vdwg.mxu0
    %v1092 = vtanh.pop %v1081
    %v1093 = vtanh.pop %v1084
    %v1094 = vtanh.pop %v1087
    %v1095 = vtanh.pop %v1090
    %v1096 = vxor.u32 %v1081, 2147483648
    %v1097 = vxor.u32 %v1084, 2147483648
    %v1098 = vxor.u32 %v1087, 2147483648
    %v1099 = vxor.u32 %v1090, 2147483648
    %v1100 = vmul.f32 %v1096, 1.442695
    %v1101 = vpow.pop %v1100
    %v1102 = vmul.f32 %v1097, 1.442695
    %v1103 = vpow.pop %v1102
    %v1104 = vmul.f32 %v1098, 1.442695
    %v1105 = vpow.pop %v1104
    %v1106 = vmul.f32 %v1099, 1.442695
    %v1107 = vpow.pop %v1106
    %v1108 = vadd.f32 %v1101, 1.0
    %v1109 = vadd.f32 %v1103, 1.0
    %v1110 = vadd.f32 %v1105, 1.0
    %v1111 = vadd.f32 %v1107, 1.0
    %v1112 = vrcp.pop %v1108
    %v1113 = vmul.f32 %v1108, %v1112
    %v1114 = vsub.f32 1.0, %v1113
    %v1115 = vmul.f32 %v1112, %v1114
    %v1116 = vadd.f32 %v1112, %v1115
    %vm1117 = vweird.f32 %v1108
    %vm1118 = vweird.f32 %v1112
    %vm1119 = vmor %vm1117, %vm1118
    %v1120 = vsel %vm1119, %v1112, %v1116
    %v1121 = vand.u32 2147483647, %v1108
    %vm1122 = vcmp.eq.f32.partialorder %v1121, 8.507059e+37
    %v1123 = vand.u32 %v1108, 2147483648
    %v1124 = vor.u32 1.1754944e-38, %v1123
    %v1125 = vsel %vm1122, %v1124, %v1120
    %v1126 = vmul.f32 1.0, %v1125
    %v1127 = vrcp.pop %v1109
    %v1128 = vmul.f32 %v1109, %v1127
    %v1129 = vsub.f32 1.0, %v1128
    %v1130 = vmul.f32 %v1127, %v1129
    %v1131 = vadd.f32 %v1127, %v1130
    %vm1132 = vweird.f32 %v1109
    %vm1133 = vweird.f32 %v1127
    %vm1134 = vmor %vm1132, %vm1133
    %v1135 = vsel %vm1134, %v1127, %v1131
    %v1136 = vand.u32 2147483647, %v1109
    %vm1137 = vcmp.eq.f32.partialorder %v1136, 8.507059e+37
    %v1138 = vand.u32 %v1109, 2147483648
    %v1139 = vor.u32 1.1754944e-38, %v1138
    %v1140 = vsel %vm1137, %v1139, %v1135
    %v1141 = vmul.f32 1.0, %v1140
    %v1142 = vrcp.pop %v1110
    %v1143 = vmul.f32 %v1110, %v1142
    %v1144 = vsub.f32 1.0, %v1143
    %v1145 = vmul.f32 %v1142, %v1144
    %v1146 = vadd.f32 %v1142, %v1145
    %vm1147 = vweird.f32 %v1110
    %vm1148 = vweird.f32 %v1142
    %vm1149 = vmor %vm1147, %vm1148
    %v1150 = vsel %vm1149, %v1142, %v1146
    %v1151 = vand.u32 2147483647, %v1110
    %vm1152 = vcmp.eq.f32.partialorder %v1151, 8.507059e+37
    %v1153 = vand.u32 %v1110, 2147483648
    %v1154 = vor.u32 1.1754944e-38, %v1153
    %v1155 = vsel %vm1152, %v1154, %v1150
    %v1156 = vmul.f32 1.0, %v1155
    %v1157 = vrcp.pop %v1111
    %v1158 = vmul.f32 %v1111, %v1157
    %v1159 = vsub.f32 1.0, %v1158
    %v1160 = vmul.f32 %v1157, %v1159
    %v1161 = vadd.f32 %v1157, %v1160
    %vm1162 = vweird.f32 %v1111
    %vm1163 = vweird.f32 %v1157
    %vm1164 = vmor %vm1162, %vm1163
    %v1165 = vsel %vm1164, %v1157, %v1161
    %v1166 = vand.u32 2147483647, %v1111
    %vm1167 = vcmp.eq.f32.partialorder %v1166, 8.507059e+37
    %v1168 = vand.u32 %v1111, 2147483648
    %v1169 = vor.u32 1.1754944e-38, %v1168
    %v1170 = vsel %vm1167, %v1169, %v1165
    %v1171 = vmul.f32 1.0, %v1170
    %v1172 = vsel %vm212, %v1092, %v1126
    %v1173 = vsel %vm212, %v1093, %v1141
    %v1174 = vsel %vm212, %v1094, %v1156
    %v1175 = vsel %vm212, %v1095, %v1171
    %v1176 = vmul.f32 %v1172, %v923
    %v1177 = vmul.f32 %v1173, %v924
    %v1178 = vmul.f32 %v1174, %v925
    %v1179 = vmul.f32 %v1175, %v926
    %1184 = vrot.lane.b32.xlu0 %v1172, 32
    %v1185 = vpop.permute.xlu0 %1184
    %1186 = vrot.lane.b32.xlu0 %v1173, 32
    %v1187 = vpop.permute.xlu0 %1186
    %1188 = vrot.lane.b32.xlu0 %v1174, 32
    %v1189 = vpop.permute.xlu0 %1188
    %1190 = vrot.lane.b32.xlu0 %v1175, 32
    %v1191 = vpop.permute.xlu0 %1190
    %v1196 = vmul.f32 %v1172, %v1185
    %v1197 = vmul.f32 %v1173, %v1187
    %v1198 = vmul.f32 %v1174, %v1189
    %v1199 = vmul.f32 %v1175, %v1191
    %1204 = vrot.lane.b32.xlu0 %v1196, 32
    %v1205 = vpop.permute.xlu0 %1204
    %1206 = vrot.lane.b32.xlu0 %v1197, 32
    %v1207 = vpop.permute.xlu0 %1206
    %1208 = vrot.lane.b32.xlu0 %v1198, 32
    %v1209 = vpop.permute.xlu0 %1208
    %1210 = vrot.lane.b32.xlu0 %v1199, 32
    %v1211 = vpop.permute.xlu0 %1210
    %v1216 = vadd.f32 %v1176, %v1205
    %v1217 = vadd.f32 %v1177, %v1207
    %v1218 = vadd.f32 %v1178, %v1209
    %v1219 = vadd.f32 %v1179, %v1211
    %v1220 = vtanh.pop %v1216
    %v1221 = vtanh.pop %v1217
    %v1222 = vtanh.pop %v1218
    %v1223 = vtanh.pop %v1219
    %1228 = vrot.lane.b32.xlu0 %v1220, 32
    %v1229 = vpop.permute.xlu0 %1228
    %1230 = vrot.lane.b32.xlu0 %v1221, 32
    %v1231 = vpop.permute.xlu0 %1230
    %1232 = vrot.lane.b32.xlu0 %v1222, 32
    %v1233 = vpop.permute.xlu0 %1232
    %1234 = vrot.lane.b32.xlu0 %v1223, 32
    %v1235 = vpop.permute.xlu0 %1234
    %v1240 = vmul.f32 %v1172, %v1229
    %v1241 = vmul.f32 %v1173, %v1231
    %v1242 = vmul.f32 %v1174, %v1233
    %v1243 = vmul.f32 %v1175, %v1235
    %s1244 = scalar_lea.vmem [#allocation4], 8
    %v1245 = vld [vmem:[%s1244] sm:$0x3]
    %v1246 = vperm.slane %v1245, 0
    %v1247 = vlaneseq
    %v1248 = vshrl.u32 %v1247, 7
    %1250 = vset.pattern.permute.xlu0 %v1248
    %1251 = vperm.xlu0 %1250, %v1246
    %v1252 = vpop.permute.xlu0 %1251
    %v1253 = vlaneseq
    %v1254 = vshrl.u32 %v1253, 7
    %v1255 = vadd.s32 %v1254, 8
    %1256 = vset.pattern.permute.xlu0 %v1255
    %1257 = vperm.xlu0 %1256, %v1246
    %v1258 = vpop.permute.xlu0 %1257
    %v1259 = vperm.slane %v1245, 1
    %v1260 = vlaneseq
    %v1261 = vshrl.u32 %v1260, 7
    %1263 = vset.pattern.permute.xlu0 %v1261
    %1264 = vperm.xlu0 %1263, %v1259
    %v1265 = vpop.permute.xlu0 %1264
    %v1266 = vlaneseq
    %v1267 = vshrl.u32 %v1266, 7
    %v1268 = vadd.s32 %v1267, 8
    %1269 = vset.pattern.permute.xlu0 %v1268
    %1270 = vperm.xlu0 %1269, %v1259
    %v1271 = vpop.permute.xlu0 %1270
    %1276 = vrot.lane.b32.xlu0 %v1240, 65
    %v1277 = vpop.permute.xlu0 %1276
    %1278 = vrot.lane.b32.xlu0 %v1241, 65
    %v1279 = vpop.permute.xlu0 %1278
    %1280 = vrot.lane.b32.xlu0 %v1242, 65
    %v1281 = vpop.permute.xlu0 %1280
    %1282 = vrot.lane.b32.xlu0 %v1243, 65
    %v1283 = vpop.permute.xlu0 %1282
    %v1288 = vsel %vm103, %v1252, %v1277
    %v1289 = vsel %vm103, %v1258, %v1279
    %v1290 = vsel %vm103, %v1265, %v1281
    %v1291 = vsel %vm103, %v1271, %v1283
    %1292 = vst.msk [vmem:[#allocation2 + $0x1] sm:$0xff] %vm54, %v1288
    %1293 = vst.msk [vmem:[#allocation2 + $0x9] sm:$0xff] %vm54, %v1289
    %1294 = vst.msk [vmem:[#allocation2 + $0x19] sm:$0xff] %vm54, %v1290
    %1295 = vst.msk [vmem:[#allocation2 + $0x21] sm:$0xff] %vm54, %v1291
    %v1296 = vld [vmem:[#allocation2] sm:$0xff]
    %v1297 = vld [vmem:[#allocation2 + $0x8] sm:$0xff]
    %v1298 = vld [vmem:[#allocation2 + $0x18] sm:$0xff]
    %v1299 = vld [vmem:[#allocation2 + $0x20] sm:$0xff]
    %v1300 = vld [vmem:[#allocation2 + $0x2] sm:$0xff]
    %v1301 = vld [vmem:[#allocation2 + $0xa] sm:$0xff]
    %v1302 = vld [vmem:[#allocation2 + $0x1a] sm:$0xff]
    %v1303 = vld [vmem:[#allocation2 + $0x22] sm:$0xff]
    %1308 = vrot.lane.b32.xlu0 %v1288, 33
    %v1309 = vpop.permute.xlu0 %1308
    %1310 = vrot.lane.b32.xlu0 %v1289, 33
    %v1311 = vpop.permute.xlu0 %1310
    %1312 = vrot.lane.b32.xlu0 %v1290, 33
    %v1313 = vpop.permute.xlu0 %1312
    %1314 = vrot.lane.b32.xlu0 %v1291, 33
    %v1315 = vpop.permute.xlu0 %1314
    %1324 = vrot.lane.b32.xlu0 %v1300, 66
    %v1325 = vpop.permute.xlu0 %1324
    %1326 = vrot.lane.b32.xlu0 %v1301, 66
    %v1327 = vpop.permute.xlu0 %1326
    %1328 = vrot.lane.b32.xlu0 %v1302, 66
    %v1329 = vpop.permute.xlu0 %1328
    %1330 = vrot.lane.b32.xlu0 %v1303, 66
    %v1331 = vpop.permute.xlu0 %1330
    %v1336 = vsel %vm54, %v1296, %v1309
    %v1337 = vsel %vm54, %v1297, %v1311
    %v1338 = vsel %vm54, %v1298, %v1313
    %v1339 = vsel %vm54, %v1299, %v1315
    %v1340 = vsel %vm156, %v1336, %v1325
    %v1341 = vsel %vm156, %v1337, %v1327
    %v1342 = vsel %vm156, %v1338, %v1329
    %v1343 = vsel %vm156, %v1339, %v1331
    %v1345 = vsel %vm164, %v1340, 0
    %v1348 = vsel %vm164, %v1341, 0
    %v1351 = vsel %vm164, %v1342, 0
    %v1354 = vsel %vm164, %v1343, 0
    %1356 = vmatpush.msra.mxu0 0.0
    %1357 = vmatpush.msra.mxu0 0.0
    %1358 = vmatpush.msra.mxu0 0.0
    %1359 = vmatpush.msra.mxu0 %v179
    %1360 = vmatpush.msra.mxu0 %v73
    %1361 = vmatpush.msra.mxu0 %v72
    %1362 = vmatpush.msra.mxu0 %v71
    %1363 = vmatpush.msra.mxu0 %v70
    %1364 = vmatpush.msra.mxu0 %v69
    %1365 = vmatpush.msra.mxu0 %v68
    %1366 = vmatpush.msra.mxu0 %v67
    %1367 = vmatpush.msra.mxu0 %v66
    %1368 = vmatpush.msra.mxu0 %v65
    %1369 = vmatpush.msra.mxu0 %v64
    %1370 = vmatpush.msra.mxu0 %v63
    %1371 = vmatpush.msra.mxu0 %v62
    %1372 = vmatmul.f32.gmra.mxu0 %v1345
    %v1373 = vpop.f32.mrf.mxu0
    %v1374 = vadd.f32 %v162, %v1373
    %1375 = vmatmul.f32.gmra.mxu0 %v1348
    %v1376 = vpop.f32.mrf.mxu0
    %v1377 = vadd.f32 %v162, %v1376
    %1378 = vmatmul.f32.gmra.mxu0 %v1351
    %v1379 = vpop.f32.mrf.mxu0
    %v1380 = vadd.f32 %v162, %v1379
    %1381 = vmatmul.f32.gmra.mxu0 %v1354
    %v1382 = vpop.f32.mrf.mxu0
    %v1383 = vadd.f32 %v162, %v1382
    %1384 = vdwg.mxu0
    %v1385 = vtanh.pop %v1374
    %v1386 = vtanh.pop %v1377
    %v1387 = vtanh.pop %v1380
    %v1388 = vtanh.pop %v1383
    %v1389 = vxor.u32 %v1374, 2147483648
    %v1390 = vxor.u32 %v1377, 2147483648
    %v1391 = vxor.u32 %v1380, 2147483648
    %v1392 = vxor.u32 %v1383, 2147483648
    %v1393 = vmul.f32 %v1389, 1.442695
    %v1394 = vpow.pop %v1393
    %v1395 = vmul.f32 %v1390, 1.442695
    %v1396 = vpow.pop %v1395
    %v1397 = vmul.f32 %v1391, 1.442695
    %v1398 = vpow.pop %v1397
    %v1399 = vmul.f32 %v1392, 1.442695
    %v1400 = vpow.pop %v1399
    %v1401 = vadd.f32 %v1394, 1.0
    %v1402 = vadd.f32 %v1396, 1.0
    %v1403 = vadd.f32 %v1398, 1.0
    %v1404 = vadd.f32 %v1400, 1.0
    %v1405 = vrcp.pop %v1401
    %v1406 = vmul.f32 %v1401, %v1405
    %v1407 = vsub.f32 1.0, %v1406
    %v1408 = vmul.f32 %v1405, %v1407
    %v1409 = vadd.f32 %v1405, %v1408
    %vm1410 = vweird.f32 %v1401
    %vm1411 = vweird.f32 %v1405
    %vm1412 = vmor %vm1410, %vm1411
    %v1413 = vsel %vm1412, %v1405, %v1409
    %v1414 = vand.u32 2147483647, %v1401
    %vm1415 = vcmp.eq.f32.partialorder %v1414, 8.507059e+37
    %v1416 = vand.u32 %v1401, 2147483648
    %v1417 = vor.u32 1.1754944e-38, %v1416
    %v1418 = vsel %vm1415, %v1417, %v1413
    %v1419 = vmul.f32 1.0, %v1418
    %v1420 = vrcp.pop %v1402
    %v1421 = vmul.f32 %v1402, %v1420
    %v1422 = vsub.f32 1.0, %v1421
    %v1423 = vmul.f32 %v1420, %v1422
    %v1424 = vadd.f32 %v1420, %v1423
    %vm1425 = vweird.f32 %v1402
    %vm1426 = vweird.f32 %v1420
    %vm1427 = vmor %vm1425, %vm1426
    %v1428 = vsel %vm1427, %v1420, %v1424
    %v1429 = vand.u32 2147483647, %v1402
    %vm1430 = vcmp.eq.f32.partialorder %v1429, 8.507059e+37
    %v1431 = vand.u32 %v1402, 2147483648
    %v1432 = vor.u32 1.1754944e-38, %v1431
    %v1433 = vsel %vm1430, %v1432, %v1428
    %v1434 = vmul.f32 1.0, %v1433
    %v1435 = vrcp.pop %v1403
    %v1436 = vmul.f32 %v1403, %v1435
    %v1437 = vsub.f32 1.0, %v1436
    %v1438 = vmul.f32 %v1435, %v1437
    %v1439 = vadd.f32 %v1435, %v1438
    %vm1440 = vweird.f32 %v1403
    %vm1441 = vweird.f32 %v1435
    %vm1442 = vmor %vm1440, %vm1441
    %v1443 = vsel %vm1442, %v1435, %v1439
    %v1444 = vand.u32 2147483647, %v1403
    %vm1445 = vcmp.eq.f32.partialorder %v1444, 8.507059e+37
    %v1446 = vand.u32 %v1403, 2147483648
    %v1447 = vor.u32 1.1754944e-38, %v1446
    %v1448 = vsel %vm1445, %v1447, %v1443
    %v1449 = vmul.f32 1.0, %v1448
    %v1450 = vrcp.pop %v1404
    %v1451 = vmul.f32 %v1404, %v1450
    %v1452 = vsub.f32 1.0, %v1451
    %v1453 = vmul.f32 %v1450, %v1452
    %v1454 = vadd.f32 %v1450, %v1453
    %vm1455 = vweird.f32 %v1404
    %vm1456 = vweird.f32 %v1450
    %vm1457 = vmor %vm1455, %vm1456
    %v1458 = vsel %vm1457, %v1450, %v1454
    %v1459 = vand.u32 2147483647, %v1404
    %vm1460 = vcmp.eq.f32.partialorder %v1459, 8.507059e+37
    %v1461 = vand.u32 %v1404, 2147483648
    %v1462 = vor.u32 1.1754944e-38, %v1461
    %v1463 = vsel %vm1460, %v1462, %v1458
    %v1464 = vmul.f32 1.0, %v1463
    %v1465 = vsel %vm212, %v1385, %v1419
    %v1466 = vsel %vm212, %v1386, %v1434
    %v1467 = vsel %vm212, %v1387, %v1449
    %v1468 = vsel %vm212, %v1388, %v1464
    %v1469 = vmul.f32 %v1465, %v1216
    %v1470 = vmul.f32 %v1466, %v1217
    %v1471 = vmul.f32 %v1467, %v1218
    %v1472 = vmul.f32 %v1468, %v1219
    %1477 = vrot.lane.b32.xlu0 %v1465, 32
    %v1478 = vpop.permute.xlu0 %1477
    %1479 = vrot.lane.b32.xlu0 %v1466, 32
    %v1480 = vpop.permute.xlu0 %1479
    %1481 = vrot.lane.b32.xlu0 %v1467, 32
    %v1482 = vpop.permute.xlu0 %1481
    %1483 = vrot.lane.b32.xlu0 %v1468, 32
    %v1484 = vpop.permute.xlu0 %1483
    %v1489 = vmul.f32 %v1465, %v1478
    %v1490 = vmul.f32 %v1466, %v1480
    %v1491 = vmul.f32 %v1467, %v1482
    %v1492 = vmul.f32 %v1468, %v1484
    %1497 = vrot.lane.b32.xlu0 %v1489, 32
    %v1498 = vpop.permute.xlu0 %1497
    %1499 = vrot.lane.b32.xlu0 %v1490, 32
    %v1500 = vpop.permute.xlu0 %1499
    %1501 = vrot.lane.b32.xlu0 %v1491, 32
    %v1502 = vpop.permute.xlu0 %1501
    %1503 = vrot.lane.b32.xlu0 %v1492, 32
    %v1504 = vpop.permute.xlu0 %1503
    %v1509 = vadd.f32 %v1469, %v1498
    %v1510 = vadd.f32 %v1470, %v1500
    %v1511 = vadd.f32 %v1471, %v1502
    %v1512 = vadd.f32 %v1472, %v1504
    %v1513 = vtanh.pop %v1509
    %v1514 = vtanh.pop %v1510
    %v1515 = vtanh.pop %v1511
    %v1516 = vtanh.pop %v1512
    %1521 = vrot.lane.b32.xlu0 %v1513, 32
    %v1522 = vpop.permute.xlu0 %1521
    %1523 = vrot.lane.b32.xlu0 %v1514, 32
    %v1524 = vpop.permute.xlu0 %1523
    %1525 = vrot.lane.b32.xlu0 %v1515, 32
    %v1526 = vpop.permute.xlu0 %1525
    %1527 = vrot.lane.b32.xlu0 %v1516, 32
    %v1528 = vpop.permute.xlu0 %1527
    %v1533 = vmul.f32 %v1465, %v1522
    %v1534 = vmul.f32 %v1466, %v1524
    %v1535 = vmul.f32 %v1467, %v1526
    %v1536 = vmul.f32 %v1468, %v1528
    %s1537 = scalar_lea.vmem [#allocation4], 10
    %v1538 = vld [vmem:[%s1537] sm:$0x3]
    %v1539 = vperm.slane %v1538, 0
    %v1540 = vlaneseq
    %v1541 = vshrl.u32 %v1540, 7
    %1543 = vset.pattern.permute.xlu0 %v1541
    %1544 = vperm.xlu0 %1543, %v1539
    %v1545 = vpop.permute.xlu0 %1544
    %v1546 = vlaneseq
    %v1547 = vshrl.u32 %v1546, 7
    %v1548 = vadd.s32 %v1547, 8
    %1549 = vset.pattern.permute.xlu0 %v1548
    %1550 = vperm.xlu0 %1549, %v1539
    %v1551 = vpop.permute.xlu0 %1550
    %v1552 = vperm.slane %v1538, 1
    %v1553 = vlaneseq
    %v1554 = vshrl.u32 %v1553, 7
    %1556 = vset.pattern.permute.xlu0 %v1554
    %1557 = vperm.xlu0 %1556, %v1552
    %v1558 = vpop.permute.xlu0 %1557
    %v1559 = vlaneseq
    %v1560 = vshrl.u32 %v1559, 7
    %v1561 = vadd.s32 %v1560, 8
    %1562 = vset.pattern.permute.xlu0 %v1561
    %1563 = vperm.xlu0 %1562, %v1552
    %v1564 = vpop.permute.xlu0 %1563
    %1569 = vrot.lane.b32.xlu0 %v1533, 65
    %v1570 = vpop.permute.xlu0 %1569
    %1571 = vrot.lane.b32.xlu0 %v1534, 65
    %v1572 = vpop.permute.xlu0 %1571
    %1573 = vrot.lane.b32.xlu0 %v1535, 65
    %v1574 = vpop.permute.xlu0 %1573
    %1575 = vrot.lane.b32.xlu0 %v1536, 65
    %v1576 = vpop.permute.xlu0 %1575
    %v1581 = vsel %vm103, %v1545, %v1570
    %v1582 = vsel %vm103, %v1551, %v1572
    %v1583 = vsel %vm103, %v1558, %v1574
    %v1584 = vsel %vm103, %v1564, %v1576
    %1585 = vst.msk [vmem:[#allocation2 + $0x1] sm:$0xff] %vm54, %v1581
    %1586 = vst.msk [vmem:[#allocation2 + $0x9] sm:$0xff] %vm54, %v1582
    %1587 = vst.msk [vmem:[#allocation2 + $0x19] sm:$0xff] %vm54, %v1583
    %1588 = vst.msk [vmem:[#allocation2 + $0x21] sm:$0xff] %vm54, %v1584
    %v1589 = vld [vmem:[#allocation2] sm:$0xff]
    %v1590 = vld [vmem:[#allocation2 + $0x8] sm:$0xff]
    %v1591 = vld [vmem:[#allocation2 + $0x18] sm:$0xff]
    %v1592 = vld [vmem:[#allocation2 + $0x20] sm:$0xff]
    %v1593 = vld [vmem:[#allocation2 + $0x2] sm:$0xff]
    %v1594 = vld [vmem:[#allocation2 + $0xa] sm:$0xff]
    %v1595 = vld [vmem:[#allocation2 + $0x1a] sm:$0xff]
    %v1596 = vld [vmem:[#allocation2 + $0x22] sm:$0xff]
    %1601 = vrot.lane.b32.xlu0 %v1581, 33
    %v1602 = vpop.permute.xlu0 %1601
    %1603 = vrot.lane.b32.xlu0 %v1582, 33
    %v1604 = vpop.permute.xlu0 %1603
    %1605 = vrot.lane.b32.xlu0 %v1583, 33
    %v1606 = vpop.permute.xlu0 %1605
    %1607 = vrot.lane.b32.xlu0 %v1584, 33
    %v1608 = vpop.permute.xlu0 %1607
    %1617 = vrot.lane.b32.xlu0 %v1593, 66
    %v1618 = vpop.permute.xlu0 %1617
    %1619 = vrot.lane.b32.xlu0 %v1594, 66
    %v1620 = vpop.permute.xlu0 %1619
    %1621 = vrot.lane.b32.xlu0 %v1595, 66
    %v1622 = vpop.permute.xlu0 %1621
    %1623 = vrot.lane.b32.xlu0 %v1596, 66
    %v1624 = vpop.permute.xlu0 %1623
    %v1629 = vsel %vm54, %v1589, %v1602
    %v1630 = vsel %vm54, %v1590, %v1604
    %v1631 = vsel %vm54, %v1591, %v1606
    %v1632 = vsel %vm54, %v1592, %v1608
    %v1633 = vsel %vm156, %v1629, %v1618
    %v1634 = vsel %vm156, %v1630, %v1620
    %v1635 = vsel %vm156, %v1631, %v1622
    %v1636 = vsel %vm156, %v1632, %v1624
    %v1638 = vsel %vm164, %v1633, 0
    %v1641 = vsel %vm164, %v1634, 0
    %v1644 = vsel %vm164, %v1635, 0
    %v1647 = vsel %vm164, %v1636, 0
    %1649 = vmatpush.msra.mxu0 0.0
    %1650 = vmatpush.msra.mxu0 0.0
    %1651 = vmatpush.msra.mxu0 0.0
    %1652 = vmatpush.msra.mxu0 %v179
    %1653 = vmatpush.msra.mxu0 %v73
    %1654 = vmatpush.msra.mxu0 %v72
    %1655 = vmatpush.msra.mxu0 %v71
    %1656 = vmatpush.msra.mxu0 %v70
    %1657 = vmatpush.msra.mxu0 %v69
    %1658 = vmatpush.msra.mxu0 %v68
    %1659 = vmatpush.msra.mxu0 %v67
    %1660 = vmatpush.msra.mxu0 %v66
    %1661 = vmatpush.msra.mxu0 %v65
    %1662 = vmatpush.msra.mxu0 %v64
    %1663 = vmatpush.msra.mxu0 %v63
    %1664 = vmatpush.msra.mxu0 %v62
    %1665 = vmatmul.f32.gmra.mxu0 %v1638
    %v1666 = vpop.f32.mrf.mxu0
    %v1667 = vadd.f32 %v162, %v1666
    %1668 = vmatmul.f32.gmra.mxu0 %v1641
    %v1669 = vpop.f32.mrf.mxu0
    %v1670 = vadd.f32 %v162, %v1669
    %1671 = vmatmul.f32.gmra.mxu0 %v1644
    %v1672 = vpop.f32.mrf.mxu0
    %v1673 = vadd.f32 %v162, %v1672
    %1674 = vmatmul.f32.gmra.mxu0 %v1647
    %v1675 = vpop.f32.mrf.mxu0
    %v1676 = vadd.f32 %v162, %v1675
    %1677 = vdwg.mxu0
    %v1678 = vtanh.pop %v1667
    %v1679 = vtanh.pop %v1670
    %v1680 = vtanh.pop %v1673
    %v1681 = vtanh.pop %v1676
    %v1682 = vxor.u32 %v1667, 2147483648
    %v1683 = vxor.u32 %v1670, 2147483648
    %v1684 = vxor.u32 %v1673, 2147483648
    %v1685 = vxor.u32 %v1676, 2147483648
    %v1686 = vmul.f32 %v1682, 1.442695
    %v1687 = vpow.pop %v1686
    %v1688 = vmul.f32 %v1683, 1.442695
    %v1689 = vpow.pop %v1688
    %v1690 = vmul.f32 %v1684, 1.442695
    %v1691 = vpow.pop %v1690
    %v1692 = vmul.f32 %v1685, 1.442695
    %v1693 = vpow.pop %v1692
    %v1694 = vadd.f32 %v1687, 1.0
    %v1695 = vadd.f32 %v1689, 1.0
    %v1696 = vadd.f32 %v1691, 1.0
    %v1697 = vadd.f32 %v1693, 1.0
    %v1698 = vrcp.pop %v1694
    %v1699 = vmul.f32 %v1694, %v1698
    %v1700 = vsub.f32 1.0, %v1699
    %v1701 = vmul.f32 %v1698, %v1700
    %v1702 = vadd.f32 %v1698, %v1701
    %vm1703 = vweird.f32 %v1694
    %vm1704 = vweird.f32 %v1698
    %vm1705 = vmor %vm1703, %vm1704
    %v1706 = vsel %vm1705, %v1698, %v1702
    %v1707 = vand.u32 2147483647, %v1694
    %vm1708 = vcmp.eq.f32.partialorder %v1707, 8.507059e+37
    %v1709 = vand.u32 %v1694, 2147483648
    %v1710 = vor.u32 1.1754944e-38, %v1709
    %v1711 = vsel %vm1708, %v1710, %v1706
    %v1712 = vmul.f32 1.0, %v1711
    %v1713 = vrcp.pop %v1695
    %v1714 = vmul.f32 %v1695, %v1713
    %v1715 = vsub.f32 1.0, %v1714
    %v1716 = vmul.f32 %v1713, %v1715
    %v1717 = vadd.f32 %v1713, %v1716
    %vm1718 = vweird.f32 %v1695
    %vm1719 = vweird.f32 %v1713
    %vm1720 = vmor %vm1718, %vm1719
    %v1721 = vsel %vm1720, %v1713, %v1717
    %v1722 = vand.u32 2147483647, %v1695
    %vm1723 = vcmp.eq.f32.partialorder %v1722, 8.507059e+37
    %v1724 = vand.u32 %v1695, 2147483648
    %v1725 = vor.u32 1.1754944e-38, %v1724
    %v1726 = vsel %vm1723, %v1725, %v1721
    %v1727 = vmul.f32 1.0, %v1726
    %v1728 = vrcp.pop %v1696
    %v1729 = vmul.f32 %v1696, %v1728
    %v1730 = vsub.f32 1.0, %v1729
    %v1731 = vmul.f32 %v1728, %v1730
    %v1732 = vadd.f32 %v1728, %v1731
    %vm1733 = vweird.f32 %v1696
    %vm1734 = vweird.f32 %v1728
    %vm1735 = vmor %vm1733, %vm1734
    %v1736 = vsel %vm1735, %v1728, %v1732
    %v1737 = vand.u32 2147483647, %v1696
    %vm1738 = vcmp.eq.f32.partialorder %v1737, 8.507059e+37
    %v1739 = vand.u32 %v1696, 2147483648
    %v1740 = vor.u32 1.1754944e-38, %v1739
    %v1741 = vsel %vm1738, %v1740, %v1736
    %v1742 = vmul.f32 1.0, %v1741
    %v1743 = vrcp.pop %v1697
    %v1744 = vmul.f32 %v1697, %v1743
    %v1745 = vsub.f32 1.0, %v1744
    %v1746 = vmul.f32 %v1743, %v1745
    %v1747 = vadd.f32 %v1743, %v1746
    %vm1748 = vweird.f32 %v1697
    %vm1749 = vweird.f32 %v1743
    %vm1750 = vmor %vm1748, %vm1749
    %v1751 = vsel %vm1750, %v1743, %v1747
    %v1752 = vand.u32 2147483647, %v1697
    %vm1753 = vcmp.eq.f32.partialorder %v1752, 8.507059e+37
    %v1754 = vand.u32 %v1697, 2147483648
    %v1755 = vor.u32 1.1754944e-38, %v1754
    %v1756 = vsel %vm1753, %v1755, %v1751
    %v1757 = vmul.f32 1.0, %v1756
    %v1758 = vsel %vm212, %v1678, %v1712
    %v1759 = vsel %vm212, %v1679, %v1727
    %v1760 = vsel %vm212, %v1680, %v1742
    %v1761 = vsel %vm212, %v1681, %v1757
    %v1762 = vmul.f32 %v1758, %v1509
    %v1763 = vmul.f32 %v1759, %v1510
    %v1764 = vmul.f32 %v1760, %v1511
    %v1765 = vmul.f32 %v1761, %v1512
    %1770 = vrot.lane.b32.xlu0 %v1758, 32
    %v1771 = vpop.permute.xlu0 %1770
    %1772 = vrot.lane.b32.xlu0 %v1759, 32
    %v1773 = vpop.permute.xlu0 %1772
    %1774 = vrot.lane.b32.xlu0 %v1760, 32
    %v1775 = vpop.permute.xlu0 %1774
    %1776 = vrot.lane.b32.xlu0 %v1761, 32
    %v1777 = vpop.permute.xlu0 %1776
    %v1782 = vmul.f32 %v1758, %v1771
    %v1783 = vmul.f32 %v1759, %v1773
    %v1784 = vmul.f32 %v1760, %v1775
    %v1785 = vmul.f32 %v1761, %v1777
    %1790 = vrot.lane.b32.xlu0 %v1782, 32
    %v1791 = vpop.permute.xlu0 %1790
    %1792 = vrot.lane.b32.xlu0 %v1783, 32
    %v1793 = vpop.permute.xlu0 %1792
    %1794 = vrot.lane.b32.xlu0 %v1784, 32
    %v1795 = vpop.permute.xlu0 %1794
    %1796 = vrot.lane.b32.xlu0 %v1785, 32
    %v1797 = vpop.permute.xlu0 %1796
    %v1802 = vadd.f32 %v1762, %v1791
    %v1803 = vadd.f32 %v1763, %v1793
    %v1804 = vadd.f32 %v1764, %v1795
    %v1805 = vadd.f32 %v1765, %v1797
    %v1806 = vtanh.pop %v1802
    %v1807 = vtanh.pop %v1803
    %v1808 = vtanh.pop %v1804
    %v1809 = vtanh.pop %v1805
    %1814 = vrot.lane.b32.xlu0 %v1806, 32
    %v1815 = vpop.permute.xlu0 %1814
    %1816 = vrot.lane.b32.xlu0 %v1807, 32
    %v1817 = vpop.permute.xlu0 %1816
    %1818 = vrot.lane.b32.xlu0 %v1808, 32
    %v1819 = vpop.permute.xlu0 %1818
    %1820 = vrot.lane.b32.xlu0 %v1809, 32
    %v1821 = vpop.permute.xlu0 %1820
    %v1826 = vmul.f32 %v1758, %v1815
    %v1827 = vmul.f32 %v1759, %v1817
    %v1828 = vmul.f32 %v1760, %v1819
    %v1829 = vmul.f32 %v1761, %v1821
    %s1830 = scalar_lea.vmem [#allocation4], 12
    %v1831 = vld [vmem:[%s1830] sm:$0x3]
    %v1832 = vperm.slane %v1831, 0
    %v1833 = vlaneseq
    %v1834 = vshrl.u32 %v1833, 7
    %1836 = vset.pattern.permute.xlu0 %v1834
    %1837 = vperm.xlu0 %1836, %v1832
    %v1838 = vpop.permute.xlu0 %1837
    %v1839 = vlaneseq
    %v1840 = vshrl.u32 %v1839, 7
    %v1841 = vadd.s32 %v1840, 8
    %1842 = vset.pattern.permute.xlu0 %v1841
    %1843 = vperm.xlu0 %1842, %v1832
    %v1844 = vpop.permute.xlu0 %1843
    %v1845 = vperm.slane %v1831, 1
    %v1846 = vlaneseq
    %v1847 = vshrl.u32 %v1846, 7
    %1849 = vset.pattern.permute.xlu0 %v1847
    %1850 = vperm.xlu0 %1849, %v1845
    %v1851 = vpop.permute.xlu0 %1850
    %v1852 = vlaneseq
    %v1853 = vshrl.u32 %v1852, 7
    %v1854 = vadd.s32 %v1853, 8
    %1855 = vset.pattern.permute.xlu0 %v1854
    %1856 = vperm.xlu0 %1855, %v1845
    %v1857 = vpop.permute.xlu0 %1856
    %1862 = vrot.lane.b32.xlu0 %v1826, 65
    %v1863 = vpop.permute.xlu0 %1862
    %1864 = vrot.lane.b32.xlu0 %v1827, 65
    %v1865 = vpop.permute.xlu0 %1864
    %1866 = vrot.lane.b32.xlu0 %v1828, 65
    %v1867 = vpop.permute.xlu0 %1866
    %1868 = vrot.lane.b32.xlu0 %v1829, 65
    %v1869 = vpop.permute.xlu0 %1868
    %v1874 = vsel %vm103, %v1838, %v1863
    %v1875 = vsel %vm103, %v1844, %v1865
    %v1876 = vsel %vm103, %v1851, %v1867
    %v1877 = vsel %vm103, %v1857, %v1869
    %1878 = vst.msk [vmem:[#allocation2 + $0x1] sm:$0xff] %vm54, %v1874
    %1879 = vst.msk [vmem:[#allocation2 + $0x9] sm:$0xff] %vm54, %v1875
    %1880 = vst.msk [vmem:[#allocation2 + $0x19] sm:$0xff] %vm54, %v1876
    %1881 = vst.msk [vmem:[#allocation2 + $0x21] sm:$0xff] %vm54, %v1877
    %v1882 = vld [vmem:[#allocation2] sm:$0xff]
    %v1883 = vld [vmem:[#allocation2 + $0x8] sm:$0xff]
    %v1884 = vld [vmem:[#allocation2 + $0x18] sm:$0xff]
    %v1885 = vld [vmem:[#allocation2 + $0x20] sm:$0xff]
    %v1886 = vld [vmem:[#allocation2 + $0x2] sm:$0xff]
    %v1887 = vld [vmem:[#allocation2 + $0xa] sm:$0xff]
    %v1888 = vld [vmem:[#allocation2 + $0x1a] sm:$0xff]
    %v1889 = vld [vmem:[#allocation2 + $0x22] sm:$0xff]
    %1894 = vrot.lane.b32.xlu0 %v1874, 33
    %v1895 = vpop.permute.xlu0 %1894
    %1896 = vrot.lane.b32.xlu0 %v1875, 33
    %v1897 = vpop.permute.xlu0 %1896
    %1898 = vrot.lane.b32.xlu0 %v1876, 33
    %v1899 = vpop.permute.xlu0 %1898
    %1900 = vrot.lane.b32.xlu0 %v1877, 33
    %v1901 = vpop.permute.xlu0 %1900
    %1910 = vrot.lane.b32.xlu0 %v1886, 66
    %v1911 = vpop.permute.xlu0 %1910
    %1912 = vrot.lane.b32.xlu0 %v1887, 66
    %v1913 = vpop.permute.xlu0 %1912
    %1914 = vrot.lane.b32.xlu0 %v1888, 66
    %v1915 = vpop.permute.xlu0 %1914
    %1916 = vrot.lane.b32.xlu0 %v1889, 66
    %v1917 = vpop.permute.xlu0 %1916
    %v1922 = vsel %vm54, %v1882, %v1895
    %v1923 = vsel %vm54, %v1883, %v1897
    %v1924 = vsel %vm54, %v1884, %v1899
    %v1925 = vsel %vm54, %v1885, %v1901
    %v1926 = vsel %vm156, %v1922, %v1911
    %v1927 = vsel %vm156, %v1923, %v1913
    %v1928 = vsel %vm156, %v1924, %v1915
    %v1929 = vsel %vm156, %v1925, %v1917
    %v1931 = vsel %vm164, %v1926, 0
    %v1934 = vsel %vm164, %v1927, 0
    %v1937 = vsel %vm164, %v1928, 0
    %v1940 = vsel %vm164, %v1929, 0
    %1942 = vmatpush.msra.mxu0 0.0
    %1943 = vmatpush.msra.mxu0 0.0
    %1944 = vmatpush.msra.mxu0 0.0
    %1945 = vmatpush.msra.mxu0 %v179
    %1946 = vmatpush.msra.mxu0 %v73
    %1947 = vmatpush.msra.mxu0 %v72
    %1948 = vmatpush.msra.mxu0 %v71
    %1949 = vmatpush.msra.mxu0 %v70
    %1950 = vmatpush.msra.mxu0 %v69
    %1951 = vmatpush.msra.mxu0 %v68
    %1952 = vmatpush.msra.mxu0 %v67
    %1953 = vmatpush.msra.mxu0 %v66
    %1954 = vmatpush.msra.mxu0 %v65
    %1955 = vmatpush.msra.mxu0 %v64
    %1956 = vmatpush.msra.mxu0 %v63
    %1957 = vmatpush.msra.mxu0 %v62
    %1958 = vmatmul.f32.gmra.mxu0 %v1931
    %v1959 = vpop.f32.mrf.mxu0
    %v1960 = vadd.f32 %v162, %v1959
    %1961 = vmatmul.f32.gmra.mxu0 %v1934
    %v1962 = vpop.f32.mrf.mxu0
    %v1963 = vadd.f32 %v162, %v1962
    %1964 = vmatmul.f32.gmra.mxu0 %v1937
    %v1965 = vpop.f32.mrf.mxu0
    %v1966 = vadd.f32 %v162, %v1965
    %1967 = vmatmul.f32.gmra.mxu0 %v1940
    %v1968 = vpop.f32.mrf.mxu0
    %v1969 = vadd.f32 %v162, %v1968
    %1970 = vdwg.mxu0
    %v1971 = vtanh.pop %v1960
    %v1972 = vtanh.pop %v1963
    %v1973 = vtanh.pop %v1966
    %v1974 = vtanh.pop %v1969
    %v1975 = vxor.u32 %v1960, 2147483648
    %v1976 = vxor.u32 %v1963, 2147483648
    %v1977 = vxor.u32 %v1966, 2147483648
    %v1978 = vxor.u32 %v1969, 2147483648
    %v1979 = vmul.f32 %v1975, 1.442695
    %v1980 = vpow.pop %v1979
    %v1981 = vmul.f32 %v1976, 1.442695
    %v1982 = vpow.pop %v1981
    %v1983 = vmul.f32 %v1977, 1.442695
    %v1984 = vpow.pop %v1983
    %v1985 = vmul.f32 %v1978, 1.442695
    %v1986 = vpow.pop %v1985
    %v1987 = vadd.f32 %v1980, 1.0
    %v1988 = vadd.f32 %v1982, 1.0
    %v1989 = vadd.f32 %v1984, 1.0
    %v1990 = vadd.f32 %v1986, 1.0
    %v1991 = vrcp.pop %v1987
    %v1992 = vmul.f32 %v1987, %v1991
    %v1993 = vsub.f32 1.0, %v1992
    %v1994 = vmul.f32 %v1991, %v1993
    %v1995 = vadd.f32 %v1991, %v1994
    %vm1996 = vweird.f32 %v1987
    %vm1997 = vweird.f32 %v1991
    %vm1998 = vmor %vm1996, %vm1997
    %v1999 = vsel %vm1998, %v1991, %v1995
    %v2000 = vand.u32 2147483647, %v1987
    %vm2001 = vcmp.eq.f32.partialorder %v2000, 8.507059e+37
    %v2002 = vand.u32 %v1987, 2147483648
    %v2003 = vor.u32 1.1754944e-38, %v2002
    %v2004 = vsel %vm2001, %v2003, %v1999
    %v2005 = vmul.f32 1.0, %v2004
    %v2006 = vrcp.pop %v1988
    %v2007 = vmul.f32 %v1988, %v2006
    %v2008 = vsub.f32 1.0, %v2007
    %v2009 = vmul.f32 %v2006, %v2008
    %v2010 = vadd.f32 %v2006, %v2009
    %vm2011 = vweird.f32 %v1988
    %vm2012 = vweird.f32 %v2006
    %vm2013 = vmor %vm2011, %vm2012
    %v2014 = vsel %vm2013, %v2006, %v2010
    %v2015 = vand.u32 2147483647, %v1988
    %vm2016 = vcmp.eq.f32.partialorder %v2015, 8.507059e+37
    %v2017 = vand.u32 %v1988, 2147483648
    %v2018 = vor.u32 1.1754944e-38, %v2017
    %v2019 = vsel %vm2016, %v2018, %v2014
    %v2020 = vmul.f32 1.0, %v2019
    %v2021 = vrcp.pop %v1989
    %v2022 = vmul.f32 %v1989, %v2021
    %v2023 = vsub.f32 1.0, %v2022
    %v2024 = vmul.f32 %v2021, %v2023
    %v2025 = vadd.f32 %v2021, %v2024
    %vm2026 = vweird.f32 %v1989
    %vm2027 = vweird.f32 %v2021
    %vm2028 = vmor %vm2026, %vm2027
    %v2029 = vsel %vm2028, %v2021, %v2025
    %v2030 = vand.u32 2147483647, %v1989
    %vm2031 = vcmp.eq.f32.partialorder %v2030, 8.507059e+37
    %v2032 = vand.u32 %v1989, 2147483648
    %v2033 = vor.u32 1.1754944e-38, %v2032
    %v2034 = vsel %vm2031, %v2033, %v2029
    %v2035 = vmul.f32 1.0, %v2034
    %v2036 = vrcp.pop %v1990
    %v2037 = vmul.f32 %v1990, %v2036
    %v2038 = vsub.f32 1.0, %v2037
    %v2039 = vmul.f32 %v2036, %v2038
    %v2040 = vadd.f32 %v2036, %v2039
    %vm2041 = vweird.f32 %v1990
    %vm2042 = vweird.f32 %v2036
    %vm2043 = vmor %vm2041, %vm2042
    %v2044 = vsel %vm2043, %v2036, %v2040
    %v2045 = vand.u32 2147483647, %v1990
    %vm2046 = vcmp.eq.f32.partialorder %v2045, 8.507059e+37
    %v2047 = vand.u32 %v1990, 2147483648
    %v2048 = vor.u32 1.1754944e-38, %v2047
    %v2049 = vsel %vm2046, %v2048, %v2044
    %v2050 = vmul.f32 1.0, %v2049
    %v2051 = vsel %vm212, %v1971, %v2005
    %v2052 = vsel %vm212, %v1972, %v2020
    %v2053 = vsel %vm212, %v1973, %v2035
    %v2054 = vsel %vm212, %v1974, %v2050
    %v2055 = vmul.f32 %v2051, %v1802
    %v2056 = vmul.f32 %v2052, %v1803
    %v2057 = vmul.f32 %v2053, %v1804
    %v2058 = vmul.f32 %v2054, %v1805
    %2063 = vrot.lane.b32.xlu0 %v2051, 32
    %v2064 = vpop.permute.xlu0 %2063
    %2065 = vrot.lane.b32.xlu0 %v2052, 32
    %v2066 = vpop.permute.xlu0 %2065
    %2067 = vrot.lane.b32.xlu0 %v2053, 32
    %v2068 = vpop.permute.xlu0 %2067
    %2069 = vrot.lane.b32.xlu0 %v2054, 32
    %v2070 = vpop.permute.xlu0 %2069
    %v2075 = vmul.f32 %v2051, %v2064
    %v2076 = vmul.f32 %v2052, %v2066
    %v2077 = vmul.f32 %v2053, %v2068
    %v2078 = vmul.f32 %v2054, %v2070
    %2083 = vrot.lane.b32.xlu0 %v2075, 32
    %v2084 = vpop.permute.xlu0 %2083
    %2085 = vrot.lane.b32.xlu0 %v2076, 32
    %v2086 = vpop.permute.xlu0 %2085
    %2087 = vrot.lane.b32.xlu0 %v2077, 32
    %v2088 = vpop.permute.xlu0 %2087
    %2089 = vrot.lane.b32.xlu0 %v2078, 32
    %v2090 = vpop.permute.xlu0 %2089
    %v2095 = vadd.f32 %v2055, %v2084
    %v2096 = vadd.f32 %v2056, %v2086
    %v2097 = vadd.f32 %v2057, %v2088
    %v2098 = vadd.f32 %v2058, %v2090
    %v2099 = vtanh.pop %v2095
    %v2100 = vtanh.pop %v2096
    %v2101 = vtanh.pop %v2097
    %v2102 = vtanh.pop %v2098
    %2107 = vrot.lane.b32.xlu0 %v2099, 32
    %v2108 = vpop.permute.xlu0 %2107
    %2109 = vrot.lane.b32.xlu0 %v2100, 32
    %v2110 = vpop.permute.xlu0 %2109
    %2111 = vrot.lane.b32.xlu0 %v2101, 32
    %v2112 = vpop.permute.xlu0 %2111
    %2113 = vrot.lane.b32.xlu0 %v2102, 32
    %v2114 = vpop.permute.xlu0 %2113
    %v2119 = vmul.f32 %v2051, %v2108
    %v2120 = vmul.f32 %v2052, %v2110
    %v2121 = vmul.f32 %v2053, %v2112
    %v2122 = vmul.f32 %v2054, %v2114
    %s2123 = scalar_lea.vmem [#allocation4], 14
    %v2124 = vld [vmem:[%s2123] sm:$0x3]
    %v2125 = vperm.slane %v2124, 0
    %v2126 = vlaneseq
    %v2127 = vshrl.u32 %v2126, 7
    %2129 = vset.pattern.permute.xlu0 %v2127
    %2130 = vperm.xlu0 %2129, %v2125
    %v2131 = vpop.permute.xlu0 %2130
    %v2132 = vlaneseq
    %v2133 = vshrl.u32 %v2132, 7
    %v2134 = vadd.s32 %v2133, 8
    %2135 = vset.pattern.permute.xlu0 %v2134
    %2136 = vperm.xlu0 %2135, %v2125
    %v2137 = vpop.permute.xlu0 %2136
    %v2138 = vperm.slane %v2124, 1
    %v2139 = vlaneseq
    %v2140 = vshrl.u32 %v2139, 7
    %2142 = vset.pattern.permute.xlu0 %v2140
    %2143 = vperm.xlu0 %2142, %v2138
    %v2144 = vpop.permute.xlu0 %2143
    %v2145 = vlaneseq
    %v2146 = vshrl.u32 %v2145, 7
    %v2147 = vadd.s32 %v2146, 8
    %2148 = vset.pattern.permute.xlu0 %v2147
    %2149 = vperm.xlu0 %2148, %v2138
    %v2150 = vpop.permute.xlu0 %2149
    %2155 = vrot.lane.b32.xlu0 %v2119, 65
    %v2156 = vpop.permute.xlu0 %2155
    %2157 = vrot.lane.b32.xlu0 %v2120, 65
    %v2158 = vpop.permute.xlu0 %2157
    %2159 = vrot.lane.b32.xlu0 %v2121, 65
    %v2160 = vpop.permute.xlu0 %2159
    %2161 = vrot.lane.b32.xlu0 %v2122, 65
    %v2162 = vpop.permute.xlu0 %2161
    %v2167 = vsel %vm103, %v2131, %v2156
    %v2168 = vsel %vm103, %v2137, %v2158
    %v2169 = vsel %vm103, %v2144, %v2160
    %v2170 = vsel %vm103, %v2150, %v2162
    %2171 = vst.msk [vmem:[#allocation2 + $0x1] sm:$0xff] %vm54, %v2167
    %2172 = vst.msk [vmem:[#allocation2 + $0x9] sm:$0xff] %vm54, %v2168
    %2173 = vst.msk [vmem:[#allocation2 + $0x19] sm:$0xff] %vm54, %v2169
    %2174 = vst.msk [vmem:[#allocation2 + $0x21] sm:$0xff] %vm54, %v2170
    %v2175 = vld [vmem:[#allocation2] sm:$0xff]
    %v2176 = vld [vmem:[#allocation2 + $0x8] sm:$0xff]
    %v2177 = vld [vmem:[#allocation2 + $0x18] sm:$0xff]
    %v2178 = vld [vmem:[#allocation2 + $0x20] sm:$0xff]
    %v2179 = vld [vmem:[#allocation2 + $0x2] sm:$0xff]
    %v2180 = vld [vmem:[#allocation2 + $0xa] sm:$0xff]
    %v2181 = vld [vmem:[#allocation2 + $0x1a] sm:$0xff]
    %v2182 = vld [vmem:[#allocation2 + $0x22] sm:$0xff]
    %2187 = vrot.lane.b32.xlu0 %v2167, 33
    %v2188 = vpop.permute.xlu0 %2187
    %2189 = vrot.lane.b32.xlu0 %v2168, 33
    %v2190 = vpop.permute.xlu0 %2189
    %2191 = vrot.lane.b32.xlu0 %v2169, 33
    %v2192 = vpop.permute.xlu0 %2191
    %2193 = vrot.lane.b32.xlu0 %v2170, 33
    %v2194 = vpop.permute.xlu0 %2193
    %2203 = vrot.lane.b32.xlu0 %v2179, 66
    %v2204 = vpop.permute.xlu0 %2203
    %2205 = vrot.lane.b32.xlu0 %v2180, 66
    %v2206 = vpop.permute.xlu0 %2205
    %2207 = vrot.lane.b32.xlu0 %v2181, 66
    %v2208 = vpop.permute.xlu0 %2207
    %2209 = vrot.lane.b32.xlu0 %v2182, 66
    %v2210 = vpop.permute.xlu0 %2209
    %v2215 = vsel %vm54, %v2175, %v2188
    %v2216 = vsel %vm54, %v2176, %v2190
    %v2217 = vsel %vm54, %v2177, %v2192
    %v2218 = vsel %vm54, %v2178, %v2194
    %v2219 = vsel %vm156, %v2215, %v2204
    %v2220 = vsel %vm156, %v2216, %v2206
    %v2221 = vsel %vm156, %v2217, %v2208
    %v2222 = vsel %vm156, %v2218, %v2210
    %v2224 = vsel %vm164, %v2219, 0
    %v2227 = vsel %vm164, %v2220, 0
    %v2230 = vsel %vm164, %v2221, 0
    %v2233 = vsel %vm164, %v2222, 0
    %2235 = vmatpush.msra.mxu0 0.0
    %2236 = vmatpush.msra.mxu0 0.0
    %2237 = vmatpush.msra.mxu0 0.0
    %2238 = vmatpush.msra.mxu0 %v179
    %2239 = vmatpush.msra.mxu0 %v73
    %2240 = vmatpush.msra.mxu0 %v72
    %2241 = vmatpush.msra.mxu0 %v71
    %2242 = vmatpush.msra.mxu0 %v70
    %2243 = vmatpush.msra.mxu0 %v69
    %2244 = vmatpush.msra.mxu0 %v68
    %2245 = vmatpush.msra.mxu0 %v67
    %2246 = vmatpush.msra.mxu0 %v66
    %2247 = vmatpush.msra.mxu0 %v65
    %2248 = vmatpush.msra.mxu0 %v64
    %2249 = vmatpush.msra.mxu0 %v63
    %2250 = vmatpush.msra.mxu0 %v62
    %2251 = vmatmul.f32.gmra.mxu0 %v2224
    %v2252 = vpop.f32.mrf.mxu0
    %v2253 = vadd.f32 %v162, %v2252
    %2254 = vmatmul.f32.gmra.mxu0 %v2227
    %v2255 = vpop.f32.mrf.mxu0
    %v2256 = vadd.f32 %v162, %v2255
    %2257 = vmatmul.f32.gmra.mxu0 %v2230
    %v2258 = vpop.f32.mrf.mxu0
    %v2259 = vadd.f32 %v162, %v2258
    %2260 = vmatmul.f32.gmra.mxu0 %v2233
    %v2261 = vpop.f32.mrf.mxu0
    %v2262 = vadd.f32 %v162, %v2261
    %2263 = vdwg.mxu0
    %v2264 = vtanh.pop %v2253
    %v2265 = vtanh.pop %v2256
    %v2266 = vtanh.pop %v2259
    %v2267 = vtanh.pop %v2262
    %v2268 = vxor.u32 %v2253, 2147483648
    %v2269 = vxor.u32 %v2256, 2147483648
    %v2270 = vxor.u32 %v2259, 2147483648
    %v2271 = vxor.u32 %v2262, 2147483648
    %v2272 = vmul.f32 %v2268, 1.442695
    %v2273 = vpow.pop %v2272
    %v2274 = vmul.f32 %v2269, 1.442695
    %v2275 = vpow.pop %v2274
    %v2276 = vmul.f32 %v2270, 1.442695
    %v2277 = vpow.pop %v2276
    %v2278 = vmul.f32 %v2271, 1.442695
    %v2279 = vpow.pop %v2278
    %v2280 = vadd.f32 %v2273, 1.0
    %v2281 = vadd.f32 %v2275, 1.0
    %v2282 = vadd.f32 %v2277, 1.0
    %v2283 = vadd.f32 %v2279, 1.0
    %v2284 = vrcp.pop %v2280
    %v2285 = vmul.f32 %v2280, %v2284
    %v2286 = vsub.f32 1.0, %v2285
    %v2287 = vmul.f32 %v2284, %v2286
    %v2288 = vadd.f32 %v2284, %v2287
    %vm2289 = vweird.f32 %v2280
    %vm2290 = vweird.f32 %v2284
    %vm2291 = vmor %vm2289, %vm2290
    %v2292 = vsel %vm2291, %v2284, %v2288
    %v2293 = vand.u32 2147483647, %v2280
    %vm2294 = vcmp.eq.f32.partialorder %v2293, 8.507059e+37
    %v2295 = vand.u32 %v2280, 2147483648
    %v2296 = vor.u32 1.1754944e-38, %v2295
    %v2297 = vsel %vm2294, %v2296, %v2292
    %v2298 = vmul.f32 1.0, %v2297
    %v2299 = vrcp.pop %v2281
    %v2300 = vmul.f32 %v2281, %v2299
    %v2301 = vsub.f32 1.0, %v2300
    %v2302 = vmul.f32 %v2299, %v2301
    %v2303 = vadd.f32 %v2299, %v2302
    %vm2304 = vweird.f32 %v2281
    %vm2305 = vweird.f32 %v2299
    %vm2306 = vmor %vm2304, %vm2305
    %v2307 = vsel %vm2306, %v2299, %v2303
    %v2308 = vand.u32 2147483647, %v2281
    %vm2309 = vcmp.eq.f32.partialorder %v2308, 8.507059e+37
    %v2310 = vand.u32 %v2281, 2147483648
    %v2311 = vor.u32 1.1754944e-38, %v2310
    %v2312 = vsel %vm2309, %v2311, %v2307
    %v2313 = vmul.f32 1.0, %v2312
    %v2314 = vrcp.pop %v2282
    %v2315 = vmul.f32 %v2282, %v2314
    %v2316 = vsub.f32 1.0, %v2315
    %v2317 = vmul.f32 %v2314, %v2316
    %v2318 = vadd.f32 %v2314, %v2317
    %vm2319 = vweird.f32 %v2282
    %vm2320 = vweird.f32 %v2314
    %vm2321 = vmor %vm2319, %vm2320
    %v2322 = vsel %vm2321, %v2314, %v2318
    %v2323 = vand.u32 2147483647, %v2282
    %vm2324 = vcmp.eq.f32.partialorder %v2323, 8.507059e+37
    %v2325 = vand.u32 %v2282, 2147483648
    %v2326 = vor.u32 1.1754944e-38, %v2325
    %v2327 = vsel %vm2324, %v2326, %v2322
    %v2328 = vmul.f32 1.0, %v2327
    %v2329 = vrcp.pop %v2283
    %v2330 = vmul.f32 %v2283, %v2329
    %v2331 = vsub.f32 1.0, %v2330
    %v2332 = vmul.f32 %v2329, %v2331
    %v2333 = vadd.f32 %v2329, %v2332
    %vm2334 = vweird.f32 %v2283
    %vm2335 = vweird.f32 %v2329
    %vm2336 = vmor %vm2334, %vm2335
    %v2337 = vsel %vm2336, %v2329, %v2333
    %v2338 = vand.u32 2147483647, %v2283
    %vm2339 = vcmp.eq.f32.partialorder %v2338, 8.507059e+37
    %v2340 = vand.u32 %v2283, 2147483648
    %v2341 = vor.u32 1.1754944e-38, %v2340
    %v2342 = vsel %vm2339, %v2341, %v2337
    %v2343 = vmul.f32 1.0, %v2342
    %v2344 = vsel %vm212, %v2264, %v2298
    %v2345 = vsel %vm212, %v2265, %v2313
    %v2346 = vsel %vm212, %v2266, %v2328
    %v2347 = vsel %vm212, %v2267, %v2343
    %v2348 = vmul.f32 %v2344, %v2095
    %v2349 = vmul.f32 %v2345, %v2096
    %v2350 = vmul.f32 %v2346, %v2097
    %v2351 = vmul.f32 %v2347, %v2098
    %2356 = vrot.lane.b32.xlu0 %v2344, 32
    %v2357 = vpop.permute.xlu0 %2356
    %2358 = vrot.lane.b32.xlu0 %v2345, 32
    %v2359 = vpop.permute.xlu0 %2358
    %2360 = vrot.lane.b32.xlu0 %v2346, 32
    %v2361 = vpop.permute.xlu0 %2360
    %2362 = vrot.lane.b32.xlu0 %v2347, 32
    %v2363 = vpop.permute.xlu0 %2362
    %v2368 = vmul.f32 %v2344, %v2357
    %v2369 = vmul.f32 %v2345, %v2359
    %v2370 = vmul.f32 %v2346, %v2361
    %v2371 = vmul.f32 %v2347, %v2363
    %2376 = vrot.lane.b32.xlu0 %v2368, 32
    %v2377 = vpop.permute.xlu0 %2376
    %2378 = vrot.lane.b32.xlu0 %v2369, 32
    %v2379 = vpop.permute.xlu0 %2378
    %2380 = vrot.lane.b32.xlu0 %v2370, 32
    %v2381 = vpop.permute.xlu0 %2380
    %2382 = vrot.lane.b32.xlu0 %v2371, 32
    %v2383 = vpop.permute.xlu0 %2382
    %v2388 = vadd.f32 %v2348, %v2377
    %v2389 = vadd.f32 %v2349, %v2379
    %v2390 = vadd.f32 %v2350, %v2381
    %v2391 = vadd.f32 %v2351, %v2383
    %v2392 = vtanh.pop %v2388
    %v2393 = vtanh.pop %v2389
    %v2394 = vtanh.pop %v2390
    %v2395 = vtanh.pop %v2391
    %2400 = vrot.lane.b32.xlu0 %v2392, 32
    %v2401 = vpop.permute.xlu0 %2400
    %2402 = vrot.lane.b32.xlu0 %v2393, 32
    %v2403 = vpop.permute.xlu0 %2402
    %2404 = vrot.lane.b32.xlu0 %v2394, 32
    %v2405 = vpop.permute.xlu0 %2404
    %2406 = vrot.lane.b32.xlu0 %v2395, 32
    %v2407 = vpop.permute.xlu0 %2406
    %v2412 = vmul.f32 %v2344, %v2401
    %v2413 = vmul.f32 %v2345, %v2403
    %v2414 = vmul.f32 %v2346, %v2405
    %v2415 = vmul.f32 %v2347, %v2407
    %vm2416 = vcmask 785920
    %v2417 = vsel %vm2416, %v2412, 0.0
    %v2418 = vsel %vm2416, %v2413, 0.0
    %v2419 = vadd.f32 %v2417, %v2418
    %v2420 = vrot.slane %v2419, 4
    %v2421 = vadd.f32 %v2419, %v2420
    %v2422 = vrot.slane %v2421, 2
    %v2423 = vadd.f32 %v2421, %v2422
    %v2424 = vrot.slane %v2423, 1
    %v2425 = vadd.f32 %v2423, %v2424
    %v2426 = vsel %vm2416, %v2414, 0.0
    %v2427 = vsel %vm2416, %v2415, 0.0
    %v2428 = vadd.f32 %v2426, %v2427
    %v2429 = vrot.slane %v2428, 4
    %v2430 = vadd.f32 %v2428, %v2429
    %v2431 = vrot.slane %v2430, 2
    %v2432 = vadd.f32 %v2430, %v2431
    %v2433 = vrot.slane %v2432, 1
    %v2434 = vadd.f32 %v2432, %v2433
    %v2435 = vmul.f32 %v2425, 0.0625
    %v2436 = vmul.f32 %v2434, 0.0625
    %v2437 = vld [vmem:[%s3] sm:$0x1]
    %v2439 = vperm.slane %v2437, 0
    %2440 = vrot.lane.b32.xlu0 %v2439, 64
    %v2441 = vpop.permute.xlu0 %2440
    %v2443 = vmul.f32 %v2435, %v2441
    %v2444 = vmul.f32 %v2436, %v2441
    %v2447 = vrot.slane %v2444, 7
    %vm2448 = vcmask 1041409
    %v2449 = vsel %vm2448, %v2447, %v2443
    %2450 = vrot.lane.b32.xlu0 %v2449, 64
    %v2451 = vpop.permute.xlu0 %2450
    %vm2453 = vcmask 254976
    %v2454 = vsel %vm2453, %v2451, 0.0
    %2455 = vadd.xlane.f32.xlu0 %v2454
    %v2456 = vpop.xlane.xlu0 %2455
    %v2457 = vld [vmem:[#allocation3] sm:$0x1]
    %v2459 = vperm.slane %v2457, 0
    %v2461 = vadd.f32 %v2456, %v2459
    %vm2462 = vcmask 1024
    %2463 = vst.msk [vmem:[%s5] sm:$0x3] %vm2462, %v2461
    // Predicated region
    $region30: #{tpu_custom_call.1} parent=1 // pred_check
      _
    $region31: #{tpu_custom_call.1} parent=1 // pred_check_branch
      %2465 = sbr.rel (0) target = $region33
    $region32: #{tpu_custom_call.1} parent=1 // pred_region
      _
    $region33: #{tpu_custom_call.1} parent=1 // pred_fallthru
      _
    // Predicated region
    $region34: #{tpu_custom_call.1} parent=1 // pred_check
      _
    $region35: #{tpu_custom_call.1} parent=1 // pred_check_branch
      %2467 = sbr.rel (0) target = $region37
    $region36: #{tpu_custom_call.1} parent=1 // pred_region
      _
    $region37: #{tpu_custom_call.1} parent=1 // pred_fallthru
      _
    %2468 = vsyncpa [#allocation5], 1
    %2469 = vsyncpa [#allocation7], 1

</llo_original>
